<compile_context>
chip_gen: v7x
topology: tpu7x:2x2x1
jax: 0.10.0
libtpu: 0.0.40
codegen_flags: <defaults>
</compile_context>

<pallas_src>
import jax
import jax.numpy as jnp
from jax import lax
from jax.experimental import pallas as pl
from jax.experimental.pallas import tpu as pltpu


def _make_additive_block_kernel(Ch, H, W):
    KH = KW = 3
    HW = H * W
    PAD = W + 1                      # flat zero halo on each side of the image
    L = HW + 2 * PAD                 # scratch length per channel

    def kernel(x_ref, wf_ref, bf_ref, wg_ref, bg_ref, out_ref, pad_ref):
        # x_ref / out_ref : (2*Ch, HW)   lane-dense (HW on the lane axis)
        # wf_ref / wg_ref : (9, Ch, Ch)  per-tap (Cout, Cin) matrices (VMEM resident)
        # bf_ref / bg_ref : (Ch, 1)
        # pad_ref         : (Ch, L) f32 scratch; halo stays zero, interior rewritten

        # Zero only the halo strips; the interior is fully overwritten by every conv.
        pad_ref[:, :PAD] = jnp.zeros((Ch, PAD), jnp.float32)
        pad_ref[:, PAD + HW:] = jnp.zeros((Ch, PAD), jnp.float32)

        # Column-validity masks for the +/-1 horizontal taps (shared by both convs).
        col = lax.broadcasted_iota(jnp.int32, (1, HW), 1) % W
        mask_l = (col >= 1).astype(jnp.float32)        # source column c-1 valid
        mask_r = (col <= W - 2).astype(jnp.float32)    # source column c+1 valid

        def conv3x3(xin, w_ref, b_ref):
            # xin: (Ch, HW) f32.  3x3 SAME conv = 9 channel-contraction matmuls (MXU).
            pad_ref[:, PAD:PAD + HW] = xin
            acc = jnp.zeros((Ch, HW), jnp.float32)
            for dy in range(KH):
                for dx in range(KW):
                    off = (dy - 1) * W + (dx - 1)
                    win = pad_ref[:, PAD + off:PAD + off + HW]   # (Ch, HW) shifted view
                    if dx == 0:
                        win = win * mask_l
                    elif dx == 2:
                        win = win * mask_r
                    acc = acc + jnp.dot(w_ref[dy * KW + dx], win,
                                        preferred_element_type=jnp.float32)
            return acc + b_ref[...]                    # (Ch, 1) broadcasts over lanes

        x1 = x_ref[:Ch, :].astype(jnp.float32)
        x2 = x_ref[Ch:, :].astype(jnp.float32)

        # y1 = x1 + Fm(x2)
        y1 = x1 + conv3x3(x2, wf_ref, bf_ref)
        y1_store = y1.astype(out_ref.dtype)
        out_ref[:Ch, :] = y1_store

        # y2 = x2 + Gm(y1)  -- Gm sees y1 at storage precision (matches the PyTorch
        # module, which computes Gm on the materialized y1; keeps exact invertibility).
        y2 = x2 + conv3x3(y1_store.astype(jnp.float32), wg_ref, bg_ref)
        out_ref[Ch:, :] = y2.astype(out_ref.dtype)

    return kernel


def additive_block_forward(x, wf, bf, wg, bg):
    """x: (N, C, H, W) NCHW, C even. wf/wg: (C//2, C//2, 3, 3) OIHW. bf/bg: (C//2,)."""
    N, C, H, W = x.shape
    assert C % 2 == 0
    Ch = C // 2
    HW = H * W
    L = HW + 2 * (W + 1)

    # Free (metadata-only) reshape: flatten spatial so HW sits on the lane axis.
    x_flat = x.reshape(N, C, HW)
    # Weights as 9 per-tap (Cout, Cin) matrices, kept resident in VMEM.
    wf_t = jnp.transpose(wf, (2, 3, 0, 1)).reshape(9, Ch, Ch).astype(jnp.float32)
    wg_t = jnp.transpose(wg, (2, 3, 0, 1)).reshape(9, Ch, Ch).astype(jnp.float32)
    bf2 = bf.reshape(Ch, 1).astype(jnp.float32)
    bg2 = bg.reshape(Ch, 1).astype(jnp.float32)

    kernel = _make_additive_block_kernel(Ch, H, W)

    x_spec = pl.BlockSpec((None, C, HW), lambda n: (n, 0, 0))
    w_spec = pl.BlockSpec((9, Ch, Ch), lambda n: (0, 0, 0))   # same block each step
    b_spec = pl.BlockSpec((Ch, 1), lambda n: (0, 0))

    out = pl.pallas_call(
        kernel,
        out_shape=jax.ShapeDtypeStruct((N, C, HW), x.dtype),
        grid_spec=pltpu.PrefetchScalarGridSpec(
            num_scalar_prefetch=0,
            grid=(N,),
            in_specs=[x_spec, w_spec, b_spec, w_spec, b_spec],
            out_specs=x_spec,
            scratch_shapes=[pltpu.VMEM((Ch, L), jnp.float32)],
        ),
        compiler_params=pltpu.CompilerParams(
            dimension_semantics=("parallel",)),   # batch samples are independent
    )(x_flat, wf_t, bf2, wg_t, bg2)

    return out.reshape(N, C, H, W)


if __name__ == "__main__":
    key = jax.random.PRNGKey(0)
    N, C, H, W = 2, 16, 16, 16       # small shapes; C must be even
    Ch = C // 2

    k1, k2, k3, k4, k5 = jax.random.split(key, 5)
    x = jax.random.normal(k1, (N, C, H, W), jnp.float32)
    scale = 1.0 / (Ch * 9) ** 0.5
    wf = jax.random.normal(k2, (Ch, Ch, 3, 3), jnp.float32) * scale
    bf = jax.random.normal(k3, (Ch,), jnp.float32) * 0.1
    wg = jax.random.normal(k4, (Ch, Ch, 3, 3), jnp.float32) * scale
    bg = jax.random.normal(k5, (Ch,), jnp.float32) * 0.1

    out = jax.jit(additive_block_forward)(x, wf, bf, wg, bg)
    out = jax.block_until_ready(out)

    # Pure-JAX reference (same semantics as the PyTorch forward with Conv2d Fm/Gm).
    def conv(xin, w, b):
        y = lax.conv_general_dilated(
            xin, w, window_strides=(1, 1), padding="SAME",
            dimension_numbers=("NCHW", "OIHW", "NCHW"))
        return y + b[None, :, None, None]

    x1r, x2r = x[:, :Ch], x[:, Ch:]
    y1r = x1r + conv(x2r, wf, bf)
    y2r = x2r + conv(y1r, wg, bg)
    ref = jnp.concatenate([y1r, y2r], axis=1)

    assert out.shape == (N, C, H, W)
    err = float(jnp.max(jnp.abs(out - ref)))
    # Tolerance covers MXU default-precision f32 (bf16 passes) vs XLA conv rounding;
    # real bugs (wrong tap/mask) would produce O(1) errors.
    assert err < 2e-2, f"max abs err {err}"
    print("KERNEL_OK")
</pallas_src>

<mosaic_0001>
module attributes {stable_mosaic.version = 11 : i64} {
  func.func @kernel(%arg0: i32, %arg1: memref<1x16x256xf32, #tpu.memory_space<vmem>>, %arg2: memref<9x8x8xf32, #tpu.memory_space<vmem>>, %arg3: memref<8x1xf32, #tpu.memory_space<vmem>>, %arg4: memref<9x8x8xf32, #tpu.memory_space<vmem>>, %arg5: memref<8x1xf32, #tpu.memory_space<vmem>>, %arg6: memref<1x16x256xf32, #tpu.memory_space<vmem>>, %arg7: memref<8x290xf32, #tpu.memory_space<vmem>>) attributes {dimension_semantics = [#tpu.dimension_semantics<parallel>], iteration_bounds = array<i64: 2>, scalar_prefetch = 0 : i64, scratch_operands = 1 : i64, tpu.core_type = #tpu.core_type<tc>, window_params = [{transform_indices = @transform_0, window_bounds = array<i64: 1, 16, 256>}, {pipeline_mode = #tpu.pipeline_mode<synchronous>, transform_indices = @transform_1, window_bounds = array<i64: 9, 8, 8>}, {pipeline_mode = #tpu.pipeline_mode<synchronous>, transform_indices = @transform_2, window_bounds = array<i64: 8, 1>}, {pipeline_mode = #tpu.pipeline_mode<synchronous>, transform_indices = @transform_3, window_bounds = array<i64: 9, 8, 8>}, {pipeline_mode = #tpu.pipeline_mode<synchronous>, transform_indices = @transform_4, window_bounds = array<i64: 8, 1>}, {transform_indices = @transform_5, window_bounds = array<i64: 1, 16, 256>}]} {
    %cst = arith.constant 0.000000e+00 : f32
    %0 = vector.broadcast %cst : f32 to vector<8x17xf32>
    %c0 = arith.constant 0 : index
    %c0_0 = arith.constant 0 : index
    %1 = vector.load %arg7[%c0, %c0_0] : memref<8x290xf32, #tpu.memory_space<vmem>>, vector<8x17xf32>
    tpu.vector_store %arg7[%c0, %c0_0], %0 {strides = array<i32>} : memref<8x290xf32, #tpu.memory_space<vmem>>, vector<8x17xf32>,
    %cst_1 = arith.constant 0.000000e+00 : f32
    %2 = vector.broadcast %cst_1 : f32 to vector<8x17xf32>
    %c0_2 = arith.constant 0 : index
    %c273 = arith.constant 273 : index
    %3 = vector.load %arg7[%c0_2, %c273] : memref<8x290xf32, #tpu.memory_space<vmem>>, vector<8x17xf32>
    tpu.vector_store %arg7[%c0_2, %c273], %2 {strides = array<i32>} : memref<8x290xf32, #tpu.memory_space<vmem>>, vector<8x17xf32>,
    %4 = tpu.iota {dimensions = array<i32: 1>} : vector<1x256xi32>
    %c16_i32 = arith.constant 16 : i32
    %c0_i32 = arith.constant 0 : i32
    %5 = arith.cmpi eq, %c16_i32, %c0_i32 : i32
    %c1_i32 = arith.constant 1 : i32
    %6 = arith.select %5, %c1_i32, %c16_i32 : i32
    %7 = vector.broadcast %6 : i32 to vector<1x256xi32>
    %8 = arith.remsi %4, %7 : vector<1x256xi32>
    %c0_i32_3 = arith.constant 0 : i32
    %9 = vector.broadcast %c0_i32_3 : i32 to vector<1x256xi32>
    %10 = arith.cmpi ne, %8, %9 : vector<1x256xi32>
    %c0_i32_4 = arith.constant 0 : i32
    %11 = vector.broadcast %c0_i32_4 : i32 to vector<1x256xi32>
    %12 = arith.cmpi slt, %8, %11 : vector<1x256xi32>
    %c0_i32_5 = arith.constant 0 : i32
    %13 = arith.cmpi slt, %6, %c0_i32_5 : i32
    %14 = vector.broadcast %13 : i1 to vector<1x256xi1>
    %15 = vector.broadcast %14 : vector<1x256xi1> to vector<1x256xi1>
    %16 = arith.xori %12, %15 : vector<1x256xi1>
    %17 = arith.andi %16, %10 : vector<1x256xi1>
    %18 = vector.broadcast %6 : i32 to vector<1x256xi32>
    %19 = arith.addi %8, %18 : vector<1x256xi32>
    %20 = arith.select %17, %19, %8 : vector<1x256xi1>, vector<1x256xi32>
    %c1_i32_6 = arith.constant 1 : i32
    %21 = vector.broadcast %c1_i32_6 : i32 to vector<1x256xi32>
    %22 = arith.cmpi sge, %20, %21 : vector<1x256xi32>
    %23 = arith.extui %22 : vector<1x256xi1> to vector<1x256xi32>
    %24 = arith.sitofp %23 : vector<1x256xi32> to vector<1x256xf32>
    %c14_i32 = arith.constant 14 : i32
    %25 = vector.broadcast %c14_i32 : i32 to vector<1x256xi32>
    %26 = arith.cmpi sle, %20, %25 : vector<1x256xi32>
    %27 = arith.extui %26 : vector<1x256xi1> to vector<1x256xi32>
    %28 = arith.sitofp %27 : vector<1x256xi32> to vector<1x256xf32>
    %c0_7 = arith.constant 0 : index
    %c0_8 = arith.constant 0 : index
    %c0_9 = arith.constant 0 : index
    %29 = vector.load %arg1[%c0_7, %c0_8, %c0_9] : memref<1x16x256xf32, #tpu.memory_space<vmem>>, vector<1x8x256xf32>
    %30 = vector.shape_cast %29 : vector<1x8x256xf32> to vector<8x256xf32>
    %c0_10 = arith.constant 0 : index
    %c8 = arith.constant 8 : index
    %c0_11 = arith.constant 0 : index
    %31 = vector.load %arg1[%c0_10, %c8, %c0_11] : memref<1x16x256xf32, #tpu.memory_space<vmem>>, vector<1x8x256xf32>
    %32 = vector.shape_cast %31 : vector<1x8x256xf32> to vector<8x256xf32>
    %c0_12 = arith.constant 0 : index
    %c17 = arith.constant 17 : index
    %33 = vector.load %arg7[%c0_12, %c17] : memref<8x290xf32, #tpu.memory_space<vmem>>, vector<8x256xf32>
    tpu.vector_store %arg7[%c0_12, %c17], %32 {strides = array<i32>} : memref<8x290xf32, #tpu.memory_space<vmem>>, vector<8x256xf32>,
    %cst_13 = arith.constant 0.000000e+00 : f32
    %34 = vector.broadcast %cst_13 : f32 to vector<8x256xf32>
    %c0_14 = arith.constant 0 : index
    %c0_15 = arith.constant 0 : index
    %35 = vector.load %arg7[%c0_14, %c0_15] : memref<8x290xf32, #tpu.memory_space<vmem>>, vector<8x256xf32>
    %36 = vector.broadcast %24 : vector<1x256xf32> to vector<8x256xf32>
    %37 = arith.mulf %35, %36 : vector<8x256xf32>
    %c0_16 = arith.constant 0 : index
    %c0_17 = arith.constant 0 : index
    %c0_18 = arith.constant 0 : index
    %38 = vector.load %arg2[%c0_16, %c0_17, %c0_18] : memref<9x8x8xf32, #tpu.memory_space<vmem>>, vector<1x8x8xf32>
    %39 = vector.shape_cast %38 : vector<1x8x8xf32> to vector<8x8xf32>
    %cst_19 = arith.constant dense<0.000000e+00> : vector<8x256xf32>
    %40 = tpu.matmul %39, %37, %cst_19 {dimension_numbers = #tpu.dot_dimension_numbers<[1], [0], [0], [1], [0, 0, 1, 1], [], []>} : vector<8x8xf32>, vector<8x256xf32>, vector<8x256xf32> -> vector<8x256xf32>
    %41 = arith.addf %34, %40 : vector<8x256xf32>
    %c0_20 = arith.constant 0 : index
    %c1 = arith.constant 1 : index
    %42 = vector.load %arg7[%c0_20, %c1] : memref<8x290xf32, #tpu.memory_space<vmem>>, vector<8x256xf32>
    %c1_21 = arith.constant 1 : index
    %c0_22 = arith.constant 0 : index
    %c0_23 = arith.constant 0 : index
    %43 = vector.load %arg2[%c1_21, %c0_22, %c0_23] : memref<9x8x8xf32, #tpu.memory_space<vmem>>, vector<1x8x8xf32>
    %44 = vector.shape_cast %43 : vector<1x8x8xf32> to vector<8x8xf32>
    %cst_24 = arith.constant dense<0.000000e+00> : vector<8x256xf32>
    %45 = tpu.matmul %44, %42, %cst_24 {dimension_numbers = #tpu.dot_dimension_numbers<[1], [0], [0], [1], [0, 0, 1, 1], [], []>} : vector<8x8xf32>, vector<8x256xf32>, vector<8x256xf32> -> vector<8x256xf32>
    %46 = arith.addf %41, %45 : vector<8x256xf32>
    %c0_25 = arith.constant 0 : index
    %c2 = arith.constant 2 : index
    %47 = vector.load %arg7[%c0_25, %c2] : memref<8x290xf32, #tpu.memory_space<vmem>>, vector<8x256xf32>
    %48 = vector.broadcast %28 : vector<1x256xf32> to vector<8x256xf32>
    %49 = arith.mulf %47, %48 : vector<8x256xf32>
    %c2_26 = arith.constant 2 : index
    %c0_27 = arith.constant 0 : index
    %c0_28 = arith.constant 0 : index
    %50 = vector.load %arg2[%c2_26, %c0_27, %c0_28] : memref<9x8x8xf32, #tpu.memory_space<vmem>>, vector<1x8x8xf32>
    %51 = vector.shape_cast %50 : vector<1x8x8xf32> to vector<8x8xf32>
    %cst_29 = arith.constant dense<0.000000e+00> : vector<8x256xf32>
    %52 = tpu.matmul %51, %49, %cst_29 {dimension_numbers = #tpu.dot_dimension_numbers<[1], [0], [0], [1], [0, 0, 1, 1], [], []>} : vector<8x8xf32>, vector<8x256xf32>, vector<8x256xf32> -> vector<8x256xf32>
    %53 = arith.addf %46, %52 : vector<8x256xf32>
    %c0_30 = arith.constant 0 : index
    %c16 = arith.constant 16 : index
    %54 = vector.load %arg7[%c0_30, %c16] : memref<8x290xf32, #tpu.memory_space<vmem>>, vector<8x256xf32>
    %55 = vector.broadcast %24 : vector<1x256xf32> to vector<8x256xf32>
    %56 = arith.mulf %54, %55 : vector<8x256xf32>
    %c3 = arith.constant 3 : index
    %c0_31 = arith.constant 0 : index
    %c0_32 = arith.constant 0 : index
    %57 = vector.load %arg2[%c3, %c0_31, %c0_32] : memref<9x8x8xf32, #tpu.memory_space<vmem>>, vector<1x8x8xf32>
    %58 = vector.shape_cast %57 : vector<1x8x8xf32> to vector<8x8xf32>
    %cst_33 = arith.constant dense<0.000000e+00> : vector<8x256xf32>
    %59 = tpu.matmul %58, %56, %cst_33 {dimension_numbers = #tpu.dot_dimension_numbers<[1], [0], [0], [1], [0, 0, 1, 1], [], []>} : vector<8x8xf32>, vector<8x256xf32>, vector<8x256xf32> -> vector<8x256xf32>
    %60 = arith.addf %53, %59 : vector<8x256xf32>
    %c0_34 = arith.constant 0 : index
    %c17_35 = arith.constant 17 : index
    %61 = vector.load %arg7[%c0_34, %c17_35] : memref<8x290xf32, #tpu.memory_space<vmem>>, vector<8x256xf32>
    %c4 = arith.constant 4 : index
    %c0_36 = arith.constant 0 : index
    %c0_37 = arith.constant 0 : index
    %62 = vector.load %arg2[%c4, %c0_36, %c0_37] : memref<9x8x8xf32, #tpu.memory_space<vmem>>, vector<1x8x8xf32>
    %63 = vector.shape_cast %62 : vector<1x8x8xf32> to vector<8x8xf32>
    %cst_38 = arith.constant dense<0.000000e+00> : vector<8x256xf32>
    %64 = tpu.matmul %63, %61, %cst_38 {dimension_numbers = #tpu.dot_dimension_numbers<[1], [0], [0], [1], [0, 0, 1, 1], [], []>} : vector<8x8xf32>, vector<8x256xf32>, vector<8x256xf32> -> vector<8x256xf32>
    %65 = arith.addf %60, %64 : vector<8x256xf32>
    %c0_39 = arith.constant 0 : index
    %c18 = arith.constant 18 : index
    %66 = vector.load %arg7[%c0_39, %c18] : memref<8x290xf32, #tpu.memory_space<vmem>>, vector<8x256xf32>
    %67 = vector.broadcast %28 : vector<1x256xf32> to vector<8x256xf32>
    %68 = arith.mulf %66, %67 : vector<8x256xf32>
    %c5 = arith.constant 5 : index
    %c0_40 = arith.constant 0 : index
    %c0_41 = arith.constant 0 : index
    %69 = vector.load %arg2[%c5, %c0_40, %c0_41] : memref<9x8x8xf32, #tpu.memory_space<vmem>>, vector<1x8x8xf32>
    %70 = vector.shape_cast %69 : vector<1x8x8xf32> to vector<8x8xf32>
    %cst_42 = arith.constant dense<0.000000e+00> : vector<8x256xf32>
    %71 = tpu.matmul %70, %68, %cst_42 {dimension_numbers = #tpu.dot_dimension_numbers<[1], [0], [0], [1], [0, 0, 1, 1], [], []>} : vector<8x8xf32>, vector<8x256xf32>, vector<8x256xf32> -> vector<8x256xf32>
    %72 = arith.addf %65, %71 : vector<8x256xf32>
    %c0_43 = arith.constant 0 : index
    %c32 = arith.constant 32 : index
    %73 = vector.load %arg7[%c0_43, %c32] : memref<8x290xf32, #tpu.memory_space<vmem>>, vector<8x256xf32>
    %74 = vector.broadcast %24 : vector<1x256xf32> to vector<8x256xf32>
    %75 = arith.mulf %73, %74 : vector<8x256xf32>
    %c6 = arith.constant 6 : index
    %c0_44 = arith.constant 0 : index
    %c0_45 = arith.constant 0 : index
    %76 = vector.load %arg2[%c6, %c0_44, %c0_45] : memref<9x8x8xf32, #tpu.memory_space<vmem>>, vector<1x8x8xf32>
    %77 = vector.shape_cast %76 : vector<1x8x8xf32> to vector<8x8xf32>
    %cst_46 = arith.constant dense<0.000000e+00> : vector<8x256xf32>
    %78 = tpu.matmul %77, %75, %cst_46 {dimension_numbers = #tpu.dot_dimension_numbers<[1], [0], [0], [1], [0, 0, 1, 1], [], []>} : vector<8x8xf32>, vector<8x256xf32>, vector<8x256xf32> -> vector<8x256xf32>
    %79 = arith.addf %72, %78 : vector<8x256xf32>
    %c0_47 = arith.constant 0 : index
    %c33 = arith.constant 33 : index
    %80 = vector.load %arg7[%c0_47, %c33] : memref<8x290xf32, #tpu.memory_space<vmem>>, vector<8x256xf32>
    %c7 = arith.constant 7 : index
    %c0_48 = arith.constant 0 : index
    %c0_49 = arith.constant 0 : index
    %81 = vector.load %arg2[%c7, %c0_48, %c0_49] : memref<9x8x8xf32, #tpu.memory_space<vmem>>, vector<1x8x8xf32>
    %82 = vector.shape_cast %81 : vector<1x8x8xf32> to vector<8x8xf32>
    %cst_50 = arith.constant dense<0.000000e+00> : vector<8x256xf32>
    %83 = tpu.matmul %82, %80, %cst_50 {dimension_numbers = #tpu.dot_dimension_numbers<[1], [0], [0], [1], [0, 0, 1, 1], [], []>} : vector<8x8xf32>, vector<8x256xf32>, vector<8x256xf32> -> vector<8x256xf32>
    %84 = arith.addf %79, %83 : vector<8x256xf32>
    %c0_51 = arith.constant 0 : index
    %c34 = arith.constant 34 : index
    %85 = vector.load %arg7[%c0_51, %c34] : memref<8x290xf32, #tpu.memory_space<vmem>>, vector<8x256xf32>
    %86 = vector.broadcast %28 : vector<1x256xf32> to vector<8x256xf32>
    %87 = arith.mulf %85, %86 : vector<8x256xf32>
    %c8_52 = arith.constant 8 : index
    %c0_53 = arith.constant 0 : index
    %c0_54 = arith.constant 0 : index
    %88 = vector.load %arg2[%c8_52, %c0_53, %c0_54] : memref<9x8x8xf32, #tpu.memory_space<vmem>>, vector<1x8x8xf32>
    %89 = vector.shape_cast %88 : vector<1x8x8xf32> to vector<8x8xf32>
    %cst_55 = arith.constant dense<0.000000e+00> : vector<8x256xf32>
    %90 = tpu.matmul %89, %87, %cst_55 {dimension_numbers = #tpu.dot_dimension_numbers<[1], [0], [0], [1], [0, 0, 1, 1], [], []>} : vector<8x8xf32>, vector<8x256xf32>, vector<8x256xf32> -> vector<8x256xf32>
    %91 = arith.addf %84, %90 : vector<8x256xf32>
    %c0_56 = arith.constant 0 : index
    %c0_57 = arith.constant 0 : index
    %92 = vector.load %arg3[%c0_56, %c0_57] : memref<8x1xf32, #tpu.memory_space<vmem>>, vector<8x1xf32>
    %93 = vector.broadcast %92 : vector<8x1xf32> to vector<8x256xf32>
    %94 = arith.addf %91, %93 : vector<8x256xf32>
    %95 = arith.addf %30, %94 : vector<8x256xf32>
    %c0_58 = arith.constant 0 : index
    %c0_59 = arith.constant 0 : index
    %c0_60 = arith.constant 0 : index
    %96 = vector.load %arg6[%c0_58, %c0_59, %c0_60] : memref<1x16x256xf32, #tpu.memory_space<vmem>>, vector<1x8x256xf32>
    %97 = vector.shape_cast %96 : vector<1x8x256xf32> to vector<8x256xf32>
    %98 = vector.shape_cast %95 : vector<8x256xf32> to vector<1x8x256xf32>
    tpu.vector_store %arg6[%c0_58, %c0_59, %c0_60], %98 {strides = array<i32>} : memref<1x16x256xf32, #tpu.memory_space<vmem>>, vector<1x8x256xf32>,
    %c0_61 = arith.constant 0 : index
    %c17_62 = arith.constant 17 : index
    %99 = vector.load %arg7[%c0_61, %c17_62] : memref<8x290xf32, #tpu.memory_space<vmem>>, vector<8x256xf32>
    tpu.vector_store %arg7[%c0_61, %c17_62], %95 {strides = array<i32>} : memref<8x290xf32, #tpu.memory_space<vmem>>, vector<8x256xf32>,
    %cst_63 = arith.constant 0.000000e+00 : f32
    %100 = vector.broadcast %cst_63 : f32 to vector<8x256xf32>
    %c0_64 = arith.constant 0 : index
    %c0_65 = arith.constant 0 : index
    %101 = vector.load %arg7[%c0_64, %c0_65] : memref<8x290xf32, #tpu.memory_space<vmem>>, vector<8x256xf32>
    %102 = vector.broadcast %24 : vector<1x256xf32> to vector<8x256xf32>
    %103 = arith.mulf %101, %102 : vector<8x256xf32>
    %c0_66 = arith.constant 0 : index
    %c0_67 = arith.constant 0 : index
    %c0_68 = arith.constant 0 : index
    %104 = vector.load %arg4[%c0_66, %c0_67, %c0_68] : memref<9x8x8xf32, #tpu.memory_space<vmem>>, vector<1x8x8xf32>
    %105 = vector.shape_cast %104 : vector<1x8x8xf32> to vector<8x8xf32>
    %cst_69 = arith.constant dense<0.000000e+00> : vector<8x256xf32>
    %106 = tpu.matmul %105, %103, %cst_69 {dimension_numbers = #tpu.dot_dimension_numbers<[1], [0], [0], [1], [0, 0, 1, 1], [], []>} : vector<8x8xf32>, vector<8x256xf32>, vector<8x256xf32> -> vector<8x256xf32>
    %107 = arith.addf %100, %106 : vector<8x256xf32>
    %c0_70 = arith.constant 0 : index
    %c1_71 = arith.constant 1 : index
    %108 = vector.load %arg7[%c0_70, %c1_71] : memref<8x290xf32, #tpu.memory_space<vmem>>, vector<8x256xf32>
    %c1_72 = arith.constant 1 : index
    %c0_73 = arith.constant 0 : index
    %c0_74 = arith.constant 0 : index
    %109 = vector.load %arg4[%c1_72, %c0_73, %c0_74] : memref<9x8x8xf32, #tpu.memory_space<vmem>>, vector<1x8x8xf32>
    %110 = vector.shape_cast %109 : vector<1x8x8xf32> to vector<8x8xf32>
    %cst_75 = arith.constant dense<0.000000e+00> : vector<8x256xf32>
    %111 = tpu.matmul %110, %108, %cst_75 {dimension_numbers = #tpu.dot_dimension_numbers<[1], [0], [0], [1], [0, 0, 1, 1], [], []>} : vector<8x8xf32>, vector<8x256xf32>, vector<8x256xf32> -> vector<8x256xf32>
    %112 = arith.addf %107, %111 : vector<8x256xf32>
    %c0_76 = arith.constant 0 : index
    %c2_77 = arith.constant 2 : index
    %113 = vector.load %arg7[%c0_76, %c2_77] : memref<8x290xf32, #tpu.memory_space<vmem>>, vector<8x256xf32>
    %114 = vector.broadcast %28 : vector<1x256xf32> to vector<8x256xf32>
    %115 = arith.mulf %113, %114 : vector<8x256xf32>
    %c2_78 = arith.constant 2 : index
    %c0_79 = arith.constant 0 : index
    %c0_80 = arith.constant 0 : index
    %116 = vector.load %arg4[%c2_78, %c0_79, %c0_80] : memref<9x8x8xf32, #tpu.memory_space<vmem>>, vector<1x8x8xf32>
    %117 = vector.shape_cast %116 : vector<1x8x8xf32> to vector<8x8xf32>
    %cst_81 = arith.constant dense<0.000000e+00> : vector<8x256xf32>
    %118 = tpu.matmul %117, %115, %cst_81 {dimension_numbers = #tpu.dot_dimension_numbers<[1], [0], [0], [1], [0, 0, 1, 1], [], []>} : vector<8x8xf32>, vector<8x256xf32>, vector<8x256xf32> -> vector<8x256xf32>
    %119 = arith.addf %112, %118 : vector<8x256xf32>
    %c0_82 = arith.constant 0 : index
    %c16_83 = arith.constant 16 : index
    %120 = vector.load %arg7[%c0_82, %c16_83] : memref<8x290xf32, #tpu.memory_space<vmem>>, vector<8x256xf32>
    %121 = vector.broadcast %24 : vector<1x256xf32> to vector<8x256xf32>
    %122 = arith.mulf %120, %121 : vector<8x256xf32>
    %c3_84 = arith.constant 3 : index
    %c0_85 = arith.constant 0 : index
    %c0_86 = arith.constant 0 : index
    %123 = vector.load %arg4[%c3_84, %c0_85, %c0_86] : memref<9x8x8xf32, #tpu.memory_space<vmem>>, vector<1x8x8xf32>
    %124 = vector.shape_cast %123 : vector<1x8x8xf32> to vector<8x8xf32>
    %cst_87 = arith.constant dense<0.000000e+00> : vector<8x256xf32>
    %125 = tpu.matmul %124, %122, %cst_87 {dimension_numbers = #tpu.dot_dimension_numbers<[1], [0], [0], [1], [0, 0, 1, 1], [], []>} : vector<8x8xf32>, vector<8x256xf32>, vector<8x256xf32> -> vector<8x256xf32>
    %126 = arith.addf %119, %125 : vector<8x256xf32>
    %c0_88 = arith.constant 0 : index
    %c17_89 = arith.constant 17 : index
    %127 = vector.load %arg7[%c0_88, %c17_89] : memref<8x290xf32, #tpu.memory_space<vmem>>, vector<8x256xf32>
    %c4_90 = arith.constant 4 : index
    %c0_91 = arith.constant 0 : index
    %c0_92 = arith.constant 0 : index
    %128 = vector.load %arg4[%c4_90, %c0_91, %c0_92] : memref<9x8x8xf32, #tpu.memory_space<vmem>>, vector<1x8x8xf32>
    %129 = vector.shape_cast %128 : vector<1x8x8xf32> to vector<8x8xf32>
    %cst_93 = arith.constant dense<0.000000e+00> : vector<8x256xf32>
    %130 = tpu.matmul %129, %127, %cst_93 {dimension_numbers = #tpu.dot_dimension_numbers<[1], [0], [0], [1], [0, 0, 1, 1], [], []>} : vector<8x8xf32>, vector<8x256xf32>, vector<8x256xf32> -> vector<8x256xf32>
    %131 = arith.addf %126, %130 : vector<8x256xf32>
    %c0_94 = arith.constant 0 : index
    %c18_95 = arith.constant 18 : index
    %132 = vector.load %arg7[%c0_94, %c18_95] : memref<8x290xf32, #tpu.memory_space<vmem>>, vector<8x256xf32>
    %133 = vector.broadcast %28 : vector<1x256xf32> to vector<8x256xf32>
    %134 = arith.mulf %132, %133 : vector<8x256xf32>
    %c5_96 = arith.constant 5 : index
    %c0_97 = arith.constant 0 : index
    %c0_98 = arith.constant 0 : index
    %135 = vector.load %arg4[%c5_96, %c0_97, %c0_98] : memref<9x8x8xf32, #tpu.memory_space<vmem>>, vector<1x8x8xf32>
    %136 = vector.shape_cast %135 : vector<1x8x8xf32> to vector<8x8xf32>
    %cst_99 = arith.constant dense<0.000000e+00> : vector<8x256xf32>
    %137 = tpu.matmul %136, %134, %cst_99 {dimension_numbers = #tpu.dot_dimension_numbers<[1], [0], [0], [1], [0, 0, 1, 1], [], []>} : vector<8x8xf32>, vector<8x256xf32>, vector<8x256xf32> -> vector<8x256xf32>
    %138 = arith.addf %131, %137 : vector<8x256xf32>
    %c0_100 = arith.constant 0 : index
    %c32_101 = arith.constant 32 : index
    %139 = vector.load %arg7[%c0_100, %c32_101] : memref<8x290xf32, #tpu.memory_space<vmem>>, vector<8x256xf32>
    %140 = vector.broadcast %24 : vector<1x256xf32> to vector<8x256xf32>
    %141 = arith.mulf %139, %140 : vector<8x256xf32>
    %c6_102 = arith.constant 6 : index
    %c0_103 = arith.constant 0 : index
    %c0_104 = arith.constant 0 : index
    %142 = vector.load %arg4[%c6_102, %c0_103, %c0_104] : memref<9x8x8xf32, #tpu.memory_space<vmem>>, vector<1x8x8xf32>
    %143 = vector.shape_cast %142 : vector<1x8x8xf32> to vector<8x8xf32>
    %cst_105 = arith.constant dense<0.000000e+00> : vector<8x256xf32>
    %144 = tpu.matmul %143, %141, %cst_105 {dimension_numbers = #tpu.dot_dimension_numbers<[1], [0], [0], [1], [0, 0, 1, 1], [], []>} : vector<8x8xf32>, vector<8x256xf32>, vector<8x256xf32> -> vector<8x256xf32>
    %145 = arith.addf %138, %144 : vector<8x256xf32>
    %c0_106 = arith.constant 0 : index
    %c33_107 = arith.constant 33 : index
    %146 = vector.load %arg7[%c0_106, %c33_107] : memref<8x290xf32, #tpu.memory_space<vmem>>, vector<8x256xf32>
    %c7_108 = arith.constant 7 : index
    %c0_109 = arith.constant 0 : index
    %c0_110 = arith.constant 0 : index
    %147 = vector.load %arg4[%c7_108, %c0_109, %c0_110] : memref<9x8x8xf32, #tpu.memory_space<vmem>>, vector<1x8x8xf32>
    %148 = vector.shape_cast %147 : vector<1x8x8xf32> to vector<8x8xf32>
    %cst_111 = arith.constant dense<0.000000e+00> : vector<8x256xf32>
    %149 = tpu.matmul %148, %146, %cst_111 {dimension_numbers = #tpu.dot_dimension_numbers<[1], [0], [0], [1], [0, 0, 1, 1], [], []>} : vector<8x8xf32>, vector<8x256xf32>, vector<8x256xf32> -> vector<8x256xf32>
    %150 = arith.addf %145, %149 : vector<8x256xf32>
    %c0_112 = arith.constant 0 : index
    %c34_113 = arith.constant 34 : index
    %151 = vector.load %arg7[%c0_112, %c34_113] : memref<8x290xf32, #tpu.memory_space<vmem>>, vector<8x256xf32>
    %152 = vector.broadcast %28 : vector<1x256xf32> to vector<8x256xf32>
    %153 = arith.mulf %151, %152 : vector<8x256xf32>
    %c8_114 = arith.constant 8 : index
    %c0_115 = arith.constant 0 : index
    %c0_116 = arith.constant 0 : index
    %154 = vector.load %arg4[%c8_114, %c0_115, %c0_116] : memref<9x8x8xf32, #tpu.memory_space<vmem>>, vector<1x8x8xf32>
    %155 = vector.shape_cast %154 : vector<1x8x8xf32> to vector<8x8xf32>
    %cst_117 = arith.constant dense<0.000000e+00> : vector<8x256xf32>
    %156 = tpu.matmul %155, %153, %cst_117 {dimension_numbers = #tpu.dot_dimension_numbers<[1], [0], [0], [1], [0, 0, 1, 1], [], []>} : vector<8x8xf32>, vector<8x256xf32>, vector<8x256xf32> -> vector<8x256xf32>
    %157 = arith.addf %150, %156 : vector<8x256xf32>
    %c0_118 = arith.constant 0 : index
    %c0_119 = arith.constant 0 : index
    %158 = vector.load %arg5[%c0_118, %c0_119] : memref<8x1xf32, #tpu.memory_space<vmem>>, vector<8x1xf32>
    %159 = vector.broadcast %158 : vector<8x1xf32> to vector<8x256xf32>
    %160 = arith.addf %157, %159 : vector<8x256xf32>
    %161 = arith.addf %32, %160 : vector<8x256xf32>
    %c0_120 = arith.constant 0 : index
    %c8_121 = arith.constant 8 : index
    %c0_122 = arith.constant 0 : index
    %162 = vector.load %arg6[%c0_120, %c8_121, %c0_122] : memref<1x16x256xf32, #tpu.memory_space<vmem>>, vector<1x8x256xf32>
    %163 = vector.shape_cast %162 : vector<1x8x256xf32> to vector<8x256xf32>
    %164 = vector.shape_cast %161 : vector<8x256xf32> to vector<1x8x256xf32>
    tpu.vector_store %arg6[%c0_120, %c8_121, %c0_122], %164 {strides = array<i32>} : memref<1x16x256xf32, #tpu.memory_space<vmem>>, vector<1x8x256xf32>,
    return
  }
  func.func @transform_0(%arg0: i32) -> (i32, i32, i32) {
    %c0_i32 = arith.constant 0 : i32
    %c0_i32_0 = arith.constant 0 : i32
    %c0_i32_1 = arith.constant 0 : i32
    return %arg0, %c0_i32, %c0_i32_0 : i32, i32, i32
  }
  func.func @transform_1(%arg0: i32) -> (i32, i32, i32) {
    %c0_i32 = arith.constant 0 : i32
    %c0_i32_0 = arith.constant 0 : i32
    %c0_i32_1 = arith.constant 0 : i32
    %c0_i32_2 = arith.constant 0 : i32
    return %c0_i32, %c0_i32_0, %c0_i32_1 : i32, i32, i32
  }
  func.func @transform_2(%arg0: i32) -> (i32, i32) {
    %c0_i32 = arith.constant 0 : i32
    %c0_i32_0 = arith.constant 0 : i32
    %c0_i32_1 = arith.constant 0 : i32
    return %c0_i32, %c0_i32_0 : i32, i32
  }
  func.func @transform_3(%arg0: i32) -> (i32, i32, i32) {
    %c0_i32 = arith.constant 0 : i32
    %c0_i32_0 = arith.constant 0 : i32
    %c0_i32_1 = arith.constant 0 : i32
    %c0_i32_2 = arith.constant 0 : i32
    return %c0_i32, %c0_i32_0, %c0_i32_1 : i32, i32, i32
  }
  func.func @transform_4(%arg0: i32) -> (i32, i32) {
    %c0_i32 = arith.constant 0 : i32
    %c0_i32_0 = arith.constant 0 : i32
    %c0_i32_1 = arith.constant 0 : i32
    return %c0_i32, %c0_i32_0 : i32, i32
  }
  func.func @transform_5(%arg0: i32) -> (i32, i32, i32) {
    %c0_i32 = arith.constant 0 : i32
    %c0_i32_0 = arith.constant 0 : i32
    %c0_i32_1 = arith.constant 0 : i32
    return %arg0, %c0_i32, %c0_i32_0 : i32, i32, i32
  }
}

</mosaic_0001>

<llo_original>
// kernel: additive_block_forward.1
$region0: #{additive_block_forward.1}
  #allocation0 [shape = 'u32[]', space=smem, size = 0x4, offset = 0x4, fixed_abs, tag = 'smem constant byte address 0x4 - core index']
  #allocation1 [shape = 'u32[144,128]{1,0:T(1,128)}', space=vmem, size = 0x12000, scoped, tag = 'internal scratch']
  #allocation2 [shape = 'f32[8,290]{1,0:T(8,128)}', space=vmem, size = 0x3000, scoped, tag = 'scratch operand']
  %s0 = inlined_call_operand.vmem [shape: f32[2,16,256], index: 0, kind: input, shape index: {}]
  %s1 = inlined_call_operand.vmem [shape: f32[9,8,8], index: 1, kind: input, shape index: {}]
  %s2 = inlined_call_operand.vmem [shape: f32[8,1], index: 2, kind: input, shape index: {}]
  %s3 = inlined_call_operand.vmem [shape: f32[9,8,8], index: 3, kind: input, shape index: {}]
  %s4 = inlined_call_operand.vmem [shape: f32[8,1], index: 4, kind: input, shape index: {}]
  %s5 = inlined_call_operand.vmem [shape: f32[2,16,256], index: 5, kind: output, shape index: {}]
  %s6 = sld [smem:[#allocation0]]
  $region53: #{additive_block_forward.1} parent=0
    _
  %s8 = ssub.s32 1, %s6
  %s9 = scalar_select 0, %s8, %s6
  loop: start=0, step=1, limit=4
  $region2: #{additive_block_forward.1} parent=0 // loop_pre_header
    _
  $region3: #{additive_block_forward.1} parent=0 // loop_header
    %s11 = sphi 0, %s15
    %p12 = scmp.ge.s32.totalorder %s11, 4
    %s21 = sphi 0, %s23
    %s24 = sphi 0, %s21
    %s25 = sphi 0, %s24
    %s41 = sphi 0, %s25
    %s45 = sphi 0, %s45
    %s47 = sphi 0, %s45
    %s48 = sphi 0, %s47
    %s62 = sphi 0, %s48
    %s66 = sphi 0, %s66
    %s68 = sphi 0, %s66
    %s69 = sphi 0, %s68
    %s83 = sphi 0, %s69
    %s87 = sphi 0, %s87
    %s89 = sphi 0, %s87
    %s90 = sphi 0, %s89
    %s104 = sphi 0, %s90
    %s108 = sphi 0, %s108
    %s110 = sphi 0, %s108
    %s111 = sphi 0, %s110
    %s125 = sphi 0, %s111
    %s131 = sphi 0, %s133
    %s134 = sphi 0, %s131
    %s135 = sphi 0, %s134
    %s151 = sphi 0, %s135
  $region4: #{additive_block_forward.1} parent=0 // loop_header_branch
    %14 = sbr.rel (%p12) target = $region8
  $region5: #{additive_block_forward.1} parent=0 // loop_body
    %s16 = ssub.s32 %s11, 1
    %s17 = ssub.s32 %s11, 2
    %s18 = sadd.s32 %s11, 1
    %s19 = ssub.s32 %s11, %s18
    %p20 = scmp.eq.s32.totalorder %s19, 0
    %s22 = sadd.s32 %s21, 1
    %s23 = scalar_select %p20, %s21, %s22
    %p26 = pneg %p20
    %p27 = scmp.eq.s32.totalorder %s11, 1
    %p28 = por %p26, %p27
    %p29 = scmp.ne.s32.totalorder %s21, %s24
    %p30 = scmp.eq.s32.totalorder %s11, 0
    %p31 = por %p29, %p30
    %p32 = scmp.ne.s32.totalorder %s21, %s24
    %p33 = scmp.eq.s32.totalorder %s16, 1
    %p34 = por %p32, %p33
    %p35 = scmp.ne.s32.totalorder %s24, %s25
    %p36 = scmp.eq.s32.totalorder %s16, 0
    %p37 = por %p35, %p36
    %p38 = scmp.ne.s32.totalorder %s24, %s25
    %p39 = scmp.eq.s32.totalorder %s17, 1
    %p40 = por %p38, %p39
    %p42 = scmp.ne.s32.totalorder %s25, %s41
    %p43 = scmp.eq.s32.totalorder %s17, 0
    %p44 = por %p42, %p43
    %s46 = sadd.s32 %s45, 1
    %p49 = scmp.eq.s32.totalorder %s11, 1
    %p50 = scmp.ne.s32.totalorder %s45, %s47
    %p51 = scmp.eq.s32.totalorder %s11, 0
    %p52 = por %p50, %p51
    %p53 = scmp.ne.s32.totalorder %s45, %s47
    %p54 = scmp.eq.s32.totalorder %s16, 1
    %p55 = por %p53, %p54
    %p56 = scmp.ne.s32.totalorder %s47, %s48
    %p57 = scmp.eq.s32.totalorder %s16, 0
    %p58 = por %p56, %p57
    %p59 = scmp.ne.s32.totalorder %s47, %s48
    %p60 = scmp.eq.s32.totalorder %s17, 1
    %p61 = por %p59, %p60
    %p63 = scmp.ne.s32.totalorder %s48, %s62
    %p64 = scmp.eq.s32.totalorder %s17, 0
    %p65 = por %p63, %p64
    %s67 = sadd.s32 %s66, 1
    %p70 = scmp.eq.s32.totalorder %s11, 1
    %p71 = scmp.ne.s32.totalorder %s66, %s68
    %p72 = scmp.eq.s32.totalorder %s11, 0
    %p73 = por %p71, %p72
    %p74 = scmp.ne.s32.totalorder %s66, %s68
    %p75 = scmp.eq.s32.totalorder %s16, 1
    %p76 = por %p74, %p75
    %p77 = scmp.ne.s32.totalorder %s68, %s69
    %p78 = scmp.eq.s32.totalorder %s16, 0
    %p79 = por %p77, %p78
    %p80 = scmp.ne.s32.totalorder %s68, %s69
    %p81 = scmp.eq.s32.totalorder %s17, 1
    %p82 = por %p80, %p81
    %p84 = scmp.ne.s32.totalorder %s69, %s83
    %p85 = scmp.eq.s32.totalorder %s17, 0
    %p86 = por %p84, %p85
    %s88 = sadd.s32 %s87, 1
    %p91 = scmp.eq.s32.totalorder %s11, 1
    %p92 = scmp.ne.s32.totalorder %s87, %s89
    %p93 = scmp.eq.s32.totalorder %s11, 0
    %p94 = por %p92, %p93
    %p95 = scmp.ne.s32.totalorder %s87, %s89
    %p96 = scmp.eq.s32.totalorder %s16, 1
    %p97 = por %p95, %p96
    %p98 = scmp.ne.s32.totalorder %s89, %s90
    %p99 = scmp.eq.s32.totalorder %s16, 0
    %p100 = por %p98, %p99
    %p101 = scmp.ne.s32.totalorder %s89, %s90
    %p102 = scmp.eq.s32.totalorder %s17, 1
    %p103 = por %p101, %p102
    %p105 = scmp.ne.s32.totalorder %s90, %s104
    %p106 = scmp.eq.s32.totalorder %s17, 0
    %p107 = por %p105, %p106
    %s109 = sadd.s32 %s108, 1
    %p112 = scmp.eq.s32.totalorder %s11, 1
    %p113 = scmp.ne.s32.totalorder %s108, %s110
    %p114 = scmp.eq.s32.totalorder %s11, 0
    %p115 = por %p113, %p114
    %p116 = scmp.ne.s32.totalorder %s108, %s110
    %p117 = scmp.eq.s32.totalorder %s16, 1
    %p118 = por %p116, %p117
    %p119 = scmp.ne.s32.totalorder %s110, %s111
    %p120 = scmp.eq.s32.totalorder %s16, 0
    %p121 = por %p119, %p120
    %p122 = scmp.ne.s32.totalorder %s110, %s111
    %p123 = scmp.eq.s32.totalorder %s17, 1
    %p124 = por %p122, %p123
    %p126 = scmp.ne.s32.totalorder %s111, %s125
    %p127 = scmp.eq.s32.totalorder %s17, 0
    %p128 = por %p126, %p127
    %s129 = ssub.s32 %s11, %s18
    %p130 = scmp.eq.s32.totalorder %s129, 0
    %s132 = sadd.s32 %s131, 1
    %s133 = scalar_select %p130, %s131, %s132
    %p136 = pneg %p130
    %p137 = scmp.eq.s32.totalorder %s11, 1
    %p138 = por %p136, %p137
    %p139 = scmp.ne.s32.totalorder %s131, %s134
    %p140 = scmp.eq.s32.totalorder %s11, 0
    %p141 = por %p139, %p140
    %p142 = scmp.ne.s32.totalorder %s131, %s134
    %p143 = scmp.eq.s32.totalorder %s16, 1
    %p144 = por %p142, %p143
    %p145 = scmp.ne.s32.totalorder %s134, %s135
    %p146 = scmp.eq.s32.totalorder %s16, 0
    %p147 = por %p145, %p146
    %p148 = scmp.ne.s32.totalorder %s134, %s135
    %p149 = scmp.eq.s32.totalorder %s17, 1
    %p150 = por %p148, %p149
    %p152 = scmp.ne.s32.totalorder %s135, %s151
    %p153 = scmp.eq.s32.totalorder %s17, 0
    %p154 = por %p152, %p153
    %p155 = scmp.le.s32.totalorder 1, %s11
    %p156 = scmp.lt.s32.totalorder %s11, 3
    %p157 = pnand %p155, %p156
    %p158 = pneg %p157
    // Predicated region
    $region9: #{additive_block_forward.1} parent=5 // pred_check
      _
    $region10: #{additive_block_forward.1} parent=5 // pred_check_branch
      %160 = sbr.rel (%p157) target = $region12
    $region11: #{additive_block_forward.1} parent=5 // pred_region
      %s161 = ssub.s32 %s11, 1
      // Predicated region
      $region13: #{additive_block_forward.1} parent=11 // pred_check
        %p162 = pneg %p58
      $region14: #{additive_block_forward.1} parent=11 // pred_check_branch
        %164 = sbr.rel (%p162) target = $region16
      $region15: #{additive_block_forward.1} parent=11 // pred_region
        _
      $region16: #{additive_block_forward.1} parent=11 // pred_fallthru
        _
      // Predicated region
      $region17: #{additive_block_forward.1} parent=11 // pred_check
        %p165 = pneg %p79
      $region18: #{additive_block_forward.1} parent=11 // pred_check_branch
        %167 = sbr.rel (%p165) target = $region20
      $region19: #{additive_block_forward.1} parent=11 // pred_region
        _
      $region20: #{additive_block_forward.1} parent=11 // pred_fallthru
        _
      // Predicated region
      $region21: #{additive_block_forward.1} parent=11 // pred_check
        %p168 = pneg %p100
      $region22: #{additive_block_forward.1} parent=11 // pred_check_branch
        %170 = sbr.rel (%p168) target = $region24
      $region23: #{additive_block_forward.1} parent=11 // pred_region
        _
      $region24: #{additive_block_forward.1} parent=11 // pred_fallthru
        _
      // Predicated region
      $region25: #{additive_block_forward.1} parent=11 // pred_check
        %p171 = pneg %p121
      $region26: #{additive_block_forward.1} parent=11 // pred_check_branch
        %173 = sbr.rel (%p171) target = $region28
      $region27: #{additive_block_forward.1} parent=11 // pred_region
        _
      $region28: #{additive_block_forward.1} parent=11 // pred_fallthru
        _
    $region12: #{additive_block_forward.1} parent=5 // pred_fallthru
      _
    %p174 = scmp.lt.s32.totalorder %s11, 2
    // Predicated region
    $region29: #{additive_block_forward.1} parent=5 // pred_check
      %p175 = pneg %p174
    $region30: #{additive_block_forward.1} parent=5 // pred_check_branch
      %177 = sbr.rel (%p175) target = $region32
    $region31: #{additive_block_forward.1} parent=5 // pred_region
      // Predicated region
      $region33: #{additive_block_forward.1} parent=31 // pred_check
        %p178 = pneg %p31
      $region34: #{additive_block_forward.1} parent=31 // pred_check_branch
        %180 = sbr.rel (%p178) target = $region36
      $region35: #{additive_block_forward.1} parent=31 // pred_region
        %p181 = scmp.lt.s32.totalorder %s11, 1
        %s182 = scalar_select %p181, %s11, 1
        %s183 = smul.addr %s182, 4
        %s184 = smul.addr %s183, 8
        %s185 = scalar_lea.vmem %s0, %s184
      $region36: #{additive_block_forward.1} parent=31 // pred_fallthru
        _
    $region32: #{additive_block_forward.1} parent=5 // pred_fallthru
      _
    %p186 = scmp.le.s32.totalorder 1, %s11
    %p187 = scmp.lt.s32.totalorder %s11, 3
    %p188 = pnand %p186, %p187
    %p189 = pneg %p188
    // Predicated region
    $region37: #{additive_block_forward.1} parent=5 // pred_check
      _
    $region38: #{additive_block_forward.1} parent=5 // pred_check_branch
      %191 = sbr.rel (%p188) target = $region40
    $region39: #{additive_block_forward.1} parent=5 // pred_region
      %s192 = ssub.s32 %s11, 1
      %p193 = scmp.lt.s32.totalorder %s16, 1
      %s194 = scalar_select %p193, %s16, 1
      %s195 = smul.addr %s194, 4
      %s196 = smul.addr %s195, 8
      %s197 = scalar_lea.vmem %s0, %s196
      %p198 = pneg %p37
      %p199 = pneg %p34
      %p200 = pneg %p58
      %p201 = pneg %p55
      %p202 = pneg %p79
      %p203 = pneg %p76
      %p204 = pneg %p100
      %p205 = pneg %p97
      %p206 = pneg %p121
      %p207 = pneg %p118
      %p208 = pneg %p147
      %p209 = pneg %p144
      %p210 = scmp.lt.s32.totalorder %s16, 1
      %s211 = scalar_select %p210, %s16, 1
      %s212 = smul.addr %s211, 4
      %s213 = smul.addr %s212, 8
      %s214 = scalar_lea.vmem %s5, %s213
      %p215 = scmp.lt.s32.totalorder %s16, 1
      %s216 = scalar_select %p215, %s16, 1
      %s217 = smul.addr %s216, 4
      %s218 = smul.addr %s217, 8
      %s219 = scalar_lea.vmem %s0, %s218
      %p220 = scmp.lt.s32.totalorder %s16, 1
      %s221 = scalar_select %p220, %s16, 1
      %s222 = smul.addr %s221, 4
      %s223 = smul.addr %s222, 8
      %s224 = scalar_lea.vmem %s5, %s223
      %vm225 = vcmask 138240
      %226 = vst.msk [vmem:[#allocation2] sm:$0xff] %vm225, 0.0
      %vm227 = vcmask 277640
      %228 = vst.msk [vmem:[#allocation2 + $0x10] sm:$0xff] %vm227, 0.0
      %v229 = vlaneseq
      %v230 = vand.u32 %v229, 127
      %v231 = vadd.s32 %v230, 128
      %vm232 = vcmp.lt.s32.totalorder %v230, 0
      %v233 = vsub.s32 0, %v230
      %v234 = vsel %vm232, %v233, %v230
      %v235 = vshrl.u32 %v234, 4
      %v236 = vand.u32 %v234, 15
      %v237 = vsub.s32 0, %v236
      %v238 = vsel %vm232, %v237, %v236
      %vm239 = vcmp.lt.s32.totalorder %v231, 0
      %v240 = vsub.s32 0, %v231
      %v241 = vsel %vm239, %v240, %v231
      %v242 = vshrl.u32 %v241, 4
      %v243 = vand.u32 %v241, 15
      %v244 = vsub.s32 0, %v243
      %v245 = vsel %vm239, %v244, %v243
      %vm246 = vcmp.ne.s32.totalorder %v238, 0
      %vm247 = vcmp.ne.s32.totalorder %v245, 0
      %vm248 = vcmp.lt.s32.totalorder %v238, 0
      %vm249 = vcmp.lt.s32.totalorder %v245, 0
      %vm250 = vmand %vm248, %vm246
      %vm251 = vmand %vm249, %vm247
      %v252 = vadd.s32 %v238, 16
      %v253 = vadd.s32 %v245, 16
      %v254 = vsel %vm250, %v252, %v238
      %v255 = vsel %vm251, %v253, %v245
      %vm256 = vcmp.ge.s32.totalorder %v254, 1
      %vm257 = vcmp.ge.s32.totalorder %v255, 1
      %v258 = vsel %vm256, 1, 0
      %v259 = vsel %vm257, 1, 0
      %v260 = vcvt.s32.f32 %v258
      %v261 = vcvt.s32.f32 %v259
      %vm262 = vcmp.le.s32.totalorder %v254, 14
      %vm263 = vcmp.le.s32.totalorder %v255, 14
      %v264 = vsel %vm262, 1, 0
      %v265 = vsel %vm263, 1, 0
      %v266 = vcvt.s32.f32 %v264
      %v267 = vcvt.s32.f32 %v265
      %v268 = vld [vmem:[%s219] sm:$0xff]
      %v269 = vld [vmem:[%s219 + $0x8] sm:$0xff]
      %v270 = vld [vmem:[%s219 + $0x10] sm:$0xff]
      %v271 = vld [vmem:[%s219 + $0x18] sm:$0xff]
      %274 = vrot.lane.b32.xlu0 %v270, 17
      %v275 = vpop.permute.xlu0 %274
      %276 = vrot.lane.b32.xlu0 %v271, 17
      %v277 = vpop.permute.xlu0 %276
      %v278 = vsel %vm225, %v275, %v277
      %vm282 = vcmask 1047688
      %283 = vst.msk [vmem:[#allocation2] sm:$0xff] %vm282, %v275
      %284 = vst [vmem:[#allocation2 + $0x8] sm:$0xff] %v278
      %285 = vst.msk [vmem:[#allocation2 + $0x10] sm:$0xff] %vm225, %v277
      %v286 = vld [vmem:[#allocation2] sm:$0xff]
      %v287 = vld [vmem:[#allocation2 + $0x8] sm:$0xff]
      %v288 = vmul.f32 %v286, %v260
      %v289 = vmul.f32 %v287, %v261
      %v290 = vld [vmem:[%s1] sm:$0xff]
      %v291 = vld [vmem:[#allocation2 + $0x10] sm:$0xff]
      %s292 = scalar_lea.vmem %s1, 8
      %v293 = vld [vmem:[%s292] sm:$0xff]
      %297 = vrot.lane.b32.xlu0 %v286, 127
      %v298 = vpop.permute.xlu0 %297
      %299 = vrot.lane.b32.xlu0 %v287, 127
      %v300 = vpop.permute.xlu0 %299
      %301 = vrot.lane.b32.xlu0 %v291, 127
      %v302 = vpop.permute.xlu0 %301
      %vm303 = vcmask 1039360
      %v304 = vsel %vm303, %v298, %v300
      %v305 = vsel %vm303, %v300, %v302
      %vm308 = vcmask 64512
      %v310 = vsel %vm308, %v293, 0
      %312 = vmatprep.subr.mxu0 %v305
      %313 = vmatpush1.msra.mxu0 %v304
      %314 = vmatprep.subr.mxu0 0.0
      %315 = vmatpush1.msra.mxu0 0.0
      %316 = vmatprep.subr.mxu0 0.0
      %317 = vmatpush1.msra.mxu0 0.0
      %318 = vmatprep.subr.mxu0 0.0
      %319 = vmatpush1.msra.mxu0 0.0
      %320 = vmatprep.subr.mxu0 0.0
      %321 = vmatpush1.msra.mxu0 0.0
      %322 = vmatprep.subr.mxu0 0.0
      %323 = vmatpush1.msra.mxu0 0.0
      %324 = vmatprep.subr.mxu0 0.0
      %325 = vmatpush1.msra.mxu0 0.0
      %326 = vmatprep.subr.mxu0 0.0
      %327 = vmatpush1.msra.mxu0 0.0
      %328 = vmatprep.subr.mxu0 0.0
      %329 = vmatpush1.msra.mxu0 0.0
      %330 = vmatprep.subr.mxu0 0.0
      %331 = vmatpush1.msra.mxu0 0.0
      %332 = vmatprep.subr.mxu0 0.0
      %333 = vmatpush1.msra.mxu0 0.0
      %334 = vmatprep.subr.mxu0 0.0
      %335 = vmatpush1.msra.mxu0 0.0
      %336 = vmatprep.subr.mxu0 0.0
      %337 = vmatpush1.msra.mxu0 0.0
      %338 = vmatprep.subr.mxu0 0.0
      %339 = vmatpush1.msra.mxu0 0.0
      %340 = vmatprep.subr.mxu0 0.0
      %341 = vmatpush1.msra.mxu0 0.0
      %342 = vmatprep.subr.mxu0 0.0
      %343 = vmatpush1.msra.mxu0 0.0
      %344 = vmatprep.subr.mxu0 0.0
      %345 = vmatpush1.msra.mxu0 0.0
      %346 = vmatprep.subr.mxu0 0.0
      %347 = vmatpush1.msra.mxu0 0.0
      %348 = vmatprep.subr.mxu0 0.0
      %349 = vmatpush1.msra.mxu0 0.0
      %350 = vmatprep.subr.mxu0 0.0
      %351 = vmatpush1.msra.mxu0 0.0
      %352 = vmatprep.subr.mxu0 0.0
      %353 = vmatpush1.msra.mxu0 0.0
      %354 = vmatprep.subr.mxu0 0.0
      %355 = vmatpush1.msra.mxu0 0.0
      %356 = vmatprep.subr.mxu0 0.0
      %357 = vmatpush1.msra.mxu0 0.0
      %358 = vmatprep.subr.mxu0 0.0
      %359 = vmatpush1.msra.mxu0 0.0
      %360 = vmatprep.subr.mxu0 0.0
      %361 = vmatpush1.msra.mxu0 0.0
      %362 = vmatprep.subr.mxu0 0.0
      %363 = vmatpush1.msra.mxu0 0.0
      %364 = vmatprep.subr.mxu0 0.0
      %365 = vmatpush1.msra.mxu0 0.0
      %366 = vmatprep.subr.mxu0 0.0
      %367 = vmatpush1.msra.mxu0 0.0
      %368 = vmatprep.subr.mxu0 0.0
      %369 = vmatpush1.msra.mxu0 0.0
      %370 = vmatprep.subr.mxu0 0.0
      %371 = vmatpush1.msra.mxu0 0.0
      %372 = vmatprep.subr.mxu0 0.0
      %373 = vmatpush1.msra.mxu0 0.0
      %374 = vmatprep.subr.mxu0 0.0
      %375 = vmatpush1.msra.mxu0 0.0
      %376 = vmatprep.mubr.f32.mxu0 0.0
      %377 = vmatmul.mubr.f32.gmra.mrb[0].mxu0 %v310
      %v378 = vpop.f32.mrb[0].mxu0
      %v379 = vadd.f32 0.0, %v378
      %v380 = vpop.f32.mrb[0].mxu0
      %v381 = vadd.f32 0.0, %v380
      %382 = vdwg.mxu0
      %v384 = vsel %vm308, %v290, 0
      %386 = vmatprep.subr.mxu0 %v289
      %387 = vmatpush1.msra.mxu0 %v288
      %388 = vmatprep.subr.mxu0 0.0
      %389 = vmatpush1.msra.mxu0 0.0
      %390 = vmatprep.subr.mxu0 0.0
      %391 = vmatpush1.msra.mxu0 0.0
      %392 = vmatprep.subr.mxu0 0.0
      %393 = vmatpush1.msra.mxu0 0.0
      %394 = vmatprep.subr.mxu0 0.0
      %395 = vmatpush1.msra.mxu0 0.0
      %396 = vmatprep.subr.mxu0 0.0
      %397 = vmatpush1.msra.mxu0 0.0
      %398 = vmatprep.subr.mxu0 0.0
      %399 = vmatpush1.msra.mxu0 0.0
      %400 = vmatprep.subr.mxu0 0.0
      %401 = vmatpush1.msra.mxu0 0.0
      %402 = vmatprep.subr.mxu0 0.0
      %403 = vmatpush1.msra.mxu0 0.0
      %404 = vmatprep.subr.mxu0 0.0
      %405 = vmatpush1.msra.mxu0 0.0
      %406 = vmatprep.subr.mxu0 0.0
      %407 = vmatpush1.msra.mxu0 0.0
      %408 = vmatprep.subr.mxu0 0.0
      %409 = vmatpush1.msra.mxu0 0.0
      %410 = vmatprep.subr.mxu0 0.0
      %411 = vmatpush1.msra.mxu0 0.0
      %412 = vmatprep.subr.mxu0 0.0
      %413 = vmatpush1.msra.mxu0 0.0
      %414 = vmatprep.subr.mxu0 0.0
      %415 = vmatpush1.msra.mxu0 0.0
      %416 = vmatprep.subr.mxu0 0.0
      %417 = vmatpush1.msra.mxu0 0.0
      %418 = vmatprep.subr.mxu0 0.0
      %419 = vmatpush1.msra.mxu0 0.0
      %420 = vmatprep.subr.mxu0 0.0
      %421 = vmatpush1.msra.mxu0 0.0
      %422 = vmatprep.subr.mxu0 0.0
      %423 = vmatpush1.msra.mxu0 0.0
      %424 = vmatprep.subr.mxu0 0.0
      %425 = vmatpush1.msra.mxu0 0.0
      %426 = vmatprep.subr.mxu0 0.0
      %427 = vmatpush1.msra.mxu0 0.0
      %428 = vmatprep.subr.mxu0 0.0
      %429 = vmatpush1.msra.mxu0 0.0
      %430 = vmatprep.subr.mxu0 0.0
      %431 = vmatpush1.msra.mxu0 0.0
      %432 = vmatprep.subr.mxu0 0.0
      %433 = vmatpush1.msra.mxu0 0.0
      %434 = vmatprep.subr.mxu0 0.0
      %435 = vmatpush1.msra.mxu0 0.0
      %436 = vmatprep.subr.mxu0 0.0
      %437 = vmatpush1.msra.mxu0 0.0
      %438 = vmatprep.subr.mxu0 0.0
      %439 = vmatpush1.msra.mxu0 0.0
      %440 = vmatprep.subr.mxu0 0.0
      %441 = vmatpush1.msra.mxu0 0.0
      %442 = vmatprep.subr.mxu0 0.0
      %443 = vmatpush1.msra.mxu0 0.0
      %444 = vmatprep.subr.mxu0 0.0
      %445 = vmatpush1.msra.mxu0 0.0
      %446 = vmatprep.subr.mxu0 0.0
      %447 = vmatpush1.msra.mxu0 0.0
      %448 = vmatprep.subr.mxu0 0.0
      %449 = vmatpush1.msra.mxu0 0.0
      %450 = vmatprep.mubr.f32.mxu0 0.0
      %451 = vmatmul.mubr.f32.gmra.mrb[0].mxu0 %v384
      %v452 = vpop.f32.mrb[0].mxu0
      %v453 = vadd.f32 %v379, %v452
      %v454 = vpop.f32.mrb[0].mxu0
      %v455 = vadd.f32 %v381, %v454
      %456 = vdwg.mxu0
      %459 = vrot.lane.b32.xlu0 %v266, 2
      %v460 = vpop.permute.xlu0 %459
      %461 = vrot.lane.b32.xlu0 %v267, 2
      %v462 = vpop.permute.xlu0 %461
      %vm463 = vcmask 15360
      %v464 = vsel %vm463, %v460, %v462
      %v468 = vmul.f32 %v286, %v460
      %v469 = vmul.f32 %v287, %v464
      %v470 = vmul.f32 %v291, %v462
      %s471 = scalar_lea.vmem %s1, 16
      %v472 = vld [vmem:[%s471] sm:$0xff]
      %476 = vrot.lane.b32.xlu0 %v468, 126
      %v477 = vpop.permute.xlu0 %476
      %478 = vrot.lane.b32.xlu0 %v469, 126
      %v479 = vpop.permute.xlu0 %478
      %480 = vrot.lane.b32.xlu0 %v470, 126
      %v481 = vpop.permute.xlu0 %480
      %vm482 = vcmask 1031168
      %v483 = vsel %vm482, %v477, %v479
      %v484 = vsel %vm482, %v479, %v481
      %v488 = vsel %vm308, %v472, 0
      %490 = vmatprep.subr.mxu0 %v484
      %491 = vmatpush1.msra.mxu0 %v483
      %492 = vmatprep.subr.mxu0 0.0
      %493 = vmatpush1.msra.mxu0 0.0
      %494 = vmatprep.subr.mxu0 0.0
      %495 = vmatpush1.msra.mxu0 0.0
      %496 = vmatprep.subr.mxu0 0.0
      %497 = vmatpush1.msra.mxu0 0.0
      %498 = vmatprep.subr.mxu0 0.0
      %499 = vmatpush1.msra.mxu0 0.0
      %500 = vmatprep.subr.mxu0 0.0
      %501 = vmatpush1.msra.mxu0 0.0
      %502 = vmatprep.subr.mxu0 0.0
      %503 = vmatpush1.msra.mxu0 0.0
      %504 = vmatprep.subr.mxu0 0.0
      %505 = vmatpush1.msra.mxu0 0.0
      %506 = vmatprep.subr.mxu0 0.0
      %507 = vmatpush1.msra.mxu0 0.0
      %508 = vmatprep.subr.mxu0 0.0
      %509 = vmatpush1.msra.mxu0 0.0
      %510 = vmatprep.subr.mxu0 0.0
      %511 = vmatpush1.msra.mxu0 0.0
      %512 = vmatprep.subr.mxu0 0.0
      %513 = vmatpush1.msra.mxu0 0.0
      %514 = vmatprep.subr.mxu0 0.0
      %515 = vmatpush1.msra.mxu0 0.0
      %516 = vmatprep.subr.mxu0 0.0
      %517 = vmatpush1.msra.mxu0 0.0
      %518 = vmatprep.subr.mxu0 0.0
      %519 = vmatpush1.msra.mxu0 0.0
      %520 = vmatprep.subr.mxu0 0.0
      %521 = vmatpush1.msra.mxu0 0.0
      %522 = vmatprep.subr.mxu0 0.0
      %523 = vmatpush1.msra.mxu0 0.0
      %524 = vmatprep.subr.mxu0 0.0
      %525 = vmatpush1.msra.mxu0 0.0
      %526 = vmatprep.subr.mxu0 0.0
      %527 = vmatpush1.msra.mxu0 0.0
      %528 = vmatprep.subr.mxu0 0.0
      %529 = vmatpush1.msra.mxu0 0.0
      %530 = vmatprep.subr.mxu0 0.0
      %531 = vmatpush1.msra.mxu0 0.0
      %532 = vmatprep.subr.mxu0 0.0
      %533 = vmatpush1.msra.mxu0 0.0
      %534 = vmatprep.subr.mxu0 0.0
      %535 = vmatpush1.msra.mxu0 0.0
      %536 = vmatprep.subr.mxu0 0.0
      %537 = vmatpush1.msra.mxu0 0.0
      %538 = vmatprep.subr.mxu0 0.0
      %539 = vmatpush1.msra.mxu0 0.0
      %540 = vmatprep.subr.mxu0 0.0
      %541 = vmatpush1.msra.mxu0 0.0
      %542 = vmatprep.subr.mxu0 0.0
      %543 = vmatpush1.msra.mxu0 0.0
      %544 = vmatprep.subr.mxu0 0.0
      %545 = vmatpush1.msra.mxu0 0.0
      %546 = vmatprep.subr.mxu0 0.0
      %547 = vmatpush1.msra.mxu0 0.0
      %548 = vmatprep.subr.mxu0 0.0
      %549 = vmatpush1.msra.mxu0 0.0
      %550 = vmatprep.subr.mxu0 0.0
      %551 = vmatpush1.msra.mxu0 0.0
      %552 = vmatprep.subr.mxu0 0.0
      %553 = vmatpush1.msra.mxu0 0.0
      %554 = vmatprep.mubr.f32.mxu0 0.0
      %555 = vmatmul.mubr.f32.gmra.mrb[0].mxu0 %v488
      %v556 = vpop.f32.mrb[0].mxu0
      %v557 = vadd.f32 0.0, %v556
      %v558 = vpop.f32.mrb[0].mxu0
      %v559 = vadd.f32 0.0, %v558
      %560 = vdwg.mxu0
      %v561 = vadd.f32 %v453, %v557
      %v562 = vadd.f32 %v455, %v559
      %565 = vrot.lane.b32.xlu0 %v260, 16
      %v566 = vpop.permute.xlu0 %565
      %567 = vrot.lane.b32.xlu0 %v261, 16
      %v568 = vpop.permute.xlu0 %567
      %vm569 = vcmask 130048
      %v570 = vsel %vm569, %v566, %v568
      %v574 = vmul.f32 %v286, %v566
      %v575 = vmul.f32 %v287, %v570
      %v576 = vmul.f32 %v291, %v568
      %s577 = scalar_lea.vmem %s1, 24
      %v578 = vld [vmem:[%s577] sm:$0xff]
      %582 = vrot.lane.b32.xlu0 %v574, 112
      %v583 = vpop.permute.xlu0 %582
      %584 = vrot.lane.b32.xlu0 %v575, 112
      %v585 = vpop.permute.xlu0 %584
      %586 = vrot.lane.b32.xlu0 %v576, 112
      %v587 = vpop.permute.xlu0 %586
      %vm588 = vcmask 916480
      %v589 = vsel %vm588, %v583, %v585
      %v590 = vsel %vm588, %v585, %v587
      %v594 = vsel %vm308, %v578, 0
      %596 = vmatprep.subr.mxu0 %v590
      %597 = vmatpush1.msra.mxu0 %v589
      %598 = vmatprep.subr.mxu0 0.0
      %599 = vmatpush1.msra.mxu0 0.0
      %600 = vmatprep.subr.mxu0 0.0
      %601 = vmatpush1.msra.mxu0 0.0
      %602 = vmatprep.subr.mxu0 0.0
      %603 = vmatpush1.msra.mxu0 0.0
      %604 = vmatprep.subr.mxu0 0.0
      %605 = vmatpush1.msra.mxu0 0.0
      %606 = vmatprep.subr.mxu0 0.0
      %607 = vmatpush1.msra.mxu0 0.0
      %608 = vmatprep.subr.mxu0 0.0
      %609 = vmatpush1.msra.mxu0 0.0
      %610 = vmatprep.subr.mxu0 0.0
      %611 = vmatpush1.msra.mxu0 0.0
      %612 = vmatprep.subr.mxu0 0.0
      %613 = vmatpush1.msra.mxu0 0.0
      %614 = vmatprep.subr.mxu0 0.0
      %615 = vmatpush1.msra.mxu0 0.0
      %616 = vmatprep.subr.mxu0 0.0
      %617 = vmatpush1.msra.mxu0 0.0
      %618 = vmatprep.subr.mxu0 0.0
      %619 = vmatpush1.msra.mxu0 0.0
      %620 = vmatprep.subr.mxu0 0.0
      %621 = vmatpush1.msra.mxu0 0.0
      %622 = vmatprep.subr.mxu0 0.0
      %623 = vmatpush1.msra.mxu0 0.0
      %624 = vmatprep.subr.mxu0 0.0
      %625 = vmatpush1.msra.mxu0 0.0
      %626 = vmatprep.subr.mxu0 0.0
      %627 = vmatpush1.msra.mxu0 0.0
      %628 = vmatprep.subr.mxu0 0.0
      %629 = vmatpush1.msra.mxu0 0.0
      %630 = vmatprep.subr.mxu0 0.0
      %631 = vmatpush1.msra.mxu0 0.0
      %632 = vmatprep.subr.mxu0 0.0
      %633 = vmatpush1.msra.mxu0 0.0
      %634 = vmatprep.subr.mxu0 0.0
      %635 = vmatpush1.msra.mxu0 0.0
      %636 = vmatprep.subr.mxu0 0.0
      %637 = vmatpush1.msra.mxu0 0.0
      %638 = vmatprep.subr.mxu0 0.0
      %639 = vmatpush1.msra.mxu0 0.0
      %640 = vmatprep.subr.mxu0 0.0
      %641 = vmatpush1.msra.mxu0 0.0
      %642 = vmatprep.subr.mxu0 0.0
      %643 = vmatpush1.msra.mxu0 0.0
      %644 = vmatprep.subr.mxu0 0.0
      %645 = vmatpush1.msra.mxu0 0.0
      %646 = vmatprep.subr.mxu0 0.0
      %647 = vmatpush1.msra.mxu0 0.0
      %648 = vmatprep.subr.mxu0 0.0
      %649 = vmatpush1.msra.mxu0 0.0
      %650 = vmatprep.subr.mxu0 0.0
      %651 = vmatpush1.msra.mxu0 0.0
      %652 = vmatprep.subr.mxu0 0.0
      %653 = vmatpush1.msra.mxu0 0.0
      %654 = vmatprep.subr.mxu0 0.0
      %655 = vmatpush1.msra.mxu0 0.0
      %656 = vmatprep.subr.mxu0 0.0
      %657 = vmatpush1.msra.mxu0 0.0
      %658 = vmatprep.subr.mxu0 0.0
      %659 = vmatpush1.msra.mxu0 0.0
      %660 = vmatprep.mubr.f32.mxu0 0.0
      %661 = vmatmul.mubr.f32.gmra.mrb[0].mxu0 %v594
      %v662 = vpop.f32.mrb[0].mxu0
      %v663 = vadd.f32 0.0, %v662
      %v664 = vpop.f32.mrb[0].mxu0
      %v665 = vadd.f32 0.0, %v664
      %666 = vdwg.mxu0
      %v667 = vadd.f32 %v561, %v663
      %v668 = vadd.f32 %v562, %v665
      %s669 = scalar_lea.vmem %s1, 32
      %v670 = vld [vmem:[%s669] sm:$0xff]
      %671 = vrot.lane.b32.xlu0 %v286, 111
      %v672 = vpop.permute.xlu0 %671
      %673 = vrot.lane.b32.xlu0 %v287, 111
      %v674 = vpop.permute.xlu0 %673
      %675 = vrot.lane.b32.xlu0 %v291, 111
      %v676 = vpop.permute.xlu0 %675
      %vm677 = vcmask 908288
      %v678 = vsel %vm677, %v672, %v674
      %v679 = vsel %vm677, %v674, %v676
      %v683 = vsel %vm308, %v670, 0
      %685 = vmatprep.subr.mxu0 %v679
      %686 = vmatpush1.msra.mxu0 %v678
      %687 = vmatprep.subr.mxu0 0.0
      %688 = vmatpush1.msra.mxu0 0.0
      %689 = vmatprep.subr.mxu0 0.0
      %690 = vmatpush1.msra.mxu0 0.0
      %691 = vmatprep.subr.mxu0 0.0
      %692 = vmatpush1.msra.mxu0 0.0
      %693 = vmatprep.subr.mxu0 0.0
      %694 = vmatpush1.msra.mxu0 0.0
      %695 = vmatprep.subr.mxu0 0.0
      %696 = vmatpush1.msra.mxu0 0.0
      %697 = vmatprep.subr.mxu0 0.0
      %698 = vmatpush1.msra.mxu0 0.0
      %699 = vmatprep.subr.mxu0 0.0
      %700 = vmatpush1.msra.mxu0 0.0
      %701 = vmatprep.subr.mxu0 0.0
      %702 = vmatpush1.msra.mxu0 0.0
      %703 = vmatprep.subr.mxu0 0.0
      %704 = vmatpush1.msra.mxu0 0.0
      %705 = vmatprep.subr.mxu0 0.0
      %706 = vmatpush1.msra.mxu0 0.0
      %707 = vmatprep.subr.mxu0 0.0
      %708 = vmatpush1.msra.mxu0 0.0
      %709 = vmatprep.subr.mxu0 0.0
      %710 = vmatpush1.msra.mxu0 0.0
      %711 = vmatprep.subr.mxu0 0.0
      %712 = vmatpush1.msra.mxu0 0.0
      %713 = vmatprep.subr.mxu0 0.0
      %714 = vmatpush1.msra.mxu0 0.0
      %715 = vmatprep.subr.mxu0 0.0
      %716 = vmatpush1.msra.mxu0 0.0
      %717 = vmatprep.subr.mxu0 0.0
      %718 = vmatpush1.msra.mxu0 0.0
      %719 = vmatprep.subr.mxu0 0.0
      %720 = vmatpush1.msra.mxu0 0.0
      %721 = vmatprep.subr.mxu0 0.0
      %722 = vmatpush1.msra.mxu0 0.0
      %723 = vmatprep.subr.mxu0 0.0
      %724 = vmatpush1.msra.mxu0 0.0
      %725 = vmatprep.subr.mxu0 0.0
      %726 = vmatpush1.msra.mxu0 0.0
      %727 = vmatprep.subr.mxu0 0.0
      %728 = vmatpush1.msra.mxu0 0.0
      %729 = vmatprep.subr.mxu0 0.0
      %730 = vmatpush1.msra.mxu0 0.0
      %731 = vmatprep.subr.mxu0 0.0
      %732 = vmatpush1.msra.mxu0 0.0
      %733 = vmatprep.subr.mxu0 0.0
      %734 = vmatpush1.msra.mxu0 0.0
      %735 = vmatprep.subr.mxu0 0.0
      %736 = vmatpush1.msra.mxu0 0.0
      %737 = vmatprep.subr.mxu0 0.0
      %738 = vmatpush1.msra.mxu0 0.0
      %739 = vmatprep.subr.mxu0 0.0
      %740 = vmatpush1.msra.mxu0 0.0
      %741 = vmatprep.subr.mxu0 0.0
      %742 = vmatpush1.msra.mxu0 0.0
      %743 = vmatprep.subr.mxu0 0.0
      %744 = vmatpush1.msra.mxu0 0.0
      %745 = vmatprep.subr.mxu0 0.0
      %746 = vmatpush1.msra.mxu0 0.0
      %747 = vmatprep.subr.mxu0 0.0
      %748 = vmatpush1.msra.mxu0 0.0
      %749 = vmatprep.mubr.f32.mxu0 0.0
      %750 = vmatmul.mubr.f32.gmra.mrb[0].mxu0 %v683
      %v751 = vpop.f32.mrb[0].mxu0
      %v752 = vadd.f32 0.0, %v751
      %v753 = vpop.f32.mrb[0].mxu0
      %v754 = vadd.f32 0.0, %v753
      %755 = vdwg.mxu0
      %v756 = vadd.f32 %v667, %v752
      %v757 = vadd.f32 %v668, %v754
      %758 = vrot.lane.b32.xlu0 %v266, 18
      %v759 = vpop.permute.xlu0 %758
      %760 = vrot.lane.b32.xlu0 %v267, 18
      %v761 = vpop.permute.xlu0 %760
      %vm762 = vcmask 146432
      %v763 = vsel %vm762, %v759, %v761
      %v767 = vmul.f32 %v286, %v759
      %v768 = vmul.f32 %v287, %v763
      %v769 = vmul.f32 %v291, %v761
      %s770 = scalar_lea.vmem %s1, 40
      %v771 = vld [vmem:[%s770] sm:$0xff]
      %775 = vrot.lane.b32.xlu0 %v767, 110
      %v776 = vpop.permute.xlu0 %775
      %777 = vrot.lane.b32.xlu0 %v768, 110
      %v778 = vpop.permute.xlu0 %777
      %779 = vrot.lane.b32.xlu0 %v769, 110
      %v780 = vpop.permute.xlu0 %779
      %vm781 = vcmask 900096
      %v782 = vsel %vm781, %v776, %v778
      %v783 = vsel %vm781, %v778, %v780
      %v787 = vsel %vm308, %v771, 0
      %789 = vmatprep.subr.mxu0 %v783
      %790 = vmatpush1.msra.mxu0 %v782
      %791 = vmatprep.subr.mxu0 0.0
      %792 = vmatpush1.msra.mxu0 0.0
      %793 = vmatprep.subr.mxu0 0.0
      %794 = vmatpush1.msra.mxu0 0.0
      %795 = vmatprep.subr.mxu0 0.0
      %796 = vmatpush1.msra.mxu0 0.0
      %797 = vmatprep.subr.mxu0 0.0
      %798 = vmatpush1.msra.mxu0 0.0
      %799 = vmatprep.subr.mxu0 0.0
      %800 = vmatpush1.msra.mxu0 0.0
      %801 = vmatprep.subr.mxu0 0.0
      %802 = vmatpush1.msra.mxu0 0.0
      %803 = vmatprep.subr.mxu0 0.0
      %804 = vmatpush1.msra.mxu0 0.0
      %805 = vmatprep.subr.mxu0 0.0
      %806 = vmatpush1.msra.mxu0 0.0
      %807 = vmatprep.subr.mxu0 0.0
      %808 = vmatpush1.msra.mxu0 0.0
      %809 = vmatprep.subr.mxu0 0.0
      %810 = vmatpush1.msra.mxu0 0.0
      %811 = vmatprep.subr.mxu0 0.0
      %812 = vmatpush1.msra.mxu0 0.0
      %813 = vmatprep.subr.mxu0 0.0
      %814 = vmatpush1.msra.mxu0 0.0
      %815 = vmatprep.subr.mxu0 0.0
      %816 = vmatpush1.msra.mxu0 0.0
      %817 = vmatprep.subr.mxu0 0.0
      %818 = vmatpush1.msra.mxu0 0.0
      %819 = vmatprep.subr.mxu0 0.0
      %820 = vmatpush1.msra.mxu0 0.0
      %821 = vmatprep.subr.mxu0 0.0
      %822 = vmatpush1.msra.mxu0 0.0
      %823 = vmatprep.subr.mxu0 0.0
      %824 = vmatpush1.msra.mxu0 0.0
      %825 = vmatprep.subr.mxu0 0.0
      %826 = vmatpush1.msra.mxu0 0.0
      %827 = vmatprep.subr.mxu0 0.0
      %828 = vmatpush1.msra.mxu0 0.0
      %829 = vmatprep.subr.mxu0 0.0
      %830 = vmatpush1.msra.mxu0 0.0
      %831 = vmatprep.subr.mxu0 0.0
      %832 = vmatpush1.msra.mxu0 0.0
      %833 = vmatprep.subr.mxu0 0.0
      %834 = vmatpush1.msra.mxu0 0.0
      %835 = vmatprep.subr.mxu0 0.0
      %836 = vmatpush1.msra.mxu0 0.0
      %837 = vmatprep.subr.mxu0 0.0
      %838 = vmatpush1.msra.mxu0 0.0
      %839 = vmatprep.subr.mxu0 0.0
      %840 = vmatpush1.msra.mxu0 0.0
      %841 = vmatprep.subr.mxu0 0.0
      %842 = vmatpush1.msra.mxu0 0.0
      %843 = vmatprep.subr.mxu0 0.0
      %844 = vmatpush1.msra.mxu0 0.0
      %845 = vmatprep.subr.mxu0 0.0
      %846 = vmatpush1.msra.mxu0 0.0
      %847 = vmatprep.subr.mxu0 0.0
      %848 = vmatpush1.msra.mxu0 0.0
      %849 = vmatprep.subr.mxu0 0.0
      %850 = vmatpush1.msra.mxu0 0.0
      %851 = vmatprep.subr.mxu0 0.0
      %852 = vmatpush1.msra.mxu0 0.0
      %853 = vmatprep.mubr.f32.mxu0 0.0
      %854 = vmatmul.mubr.f32.gmra.mrb[0].mxu0 %v787
      %v855 = vpop.f32.mrb[0].mxu0
      %v856 = vadd.f32 0.0, %v855
      %v857 = vpop.f32.mrb[0].mxu0
      %v858 = vadd.f32 0.0, %v857
      %859 = vdwg.mxu0
      %v860 = vadd.f32 %v756, %v856
      %v861 = vadd.f32 %v757, %v858
      %862 = vrot.lane.b32.xlu0 %v260, 32
      %v863 = vpop.permute.xlu0 %862
      %864 = vrot.lane.b32.xlu0 %v261, 32
      %v865 = vpop.permute.xlu0 %864
      %vm866 = vcmask 261120
      %v867 = vsel %vm866, %v863, %v865
      %v871 = vmul.f32 %v286, %v863
      %v872 = vmul.f32 %v287, %v867
      %v873 = vmul.f32 %v291, %v865
      %s874 = scalar_lea.vmem %s1, 48
      %v875 = vld [vmem:[%s874] sm:$0xff]
      %879 = vrot.lane.b32.xlu0 %v871, 96
      %v880 = vpop.permute.xlu0 %879
      %881 = vrot.lane.b32.xlu0 %v872, 96
      %v882 = vpop.permute.xlu0 %881
      %883 = vrot.lane.b32.xlu0 %v873, 96
      %v884 = vpop.permute.xlu0 %883
      %vm885 = vcmask 785408
      %v886 = vsel %vm885, %v880, %v882
      %v887 = vsel %vm885, %v882, %v884
      %v891 = vsel %vm308, %v875, 0
      %893 = vmatprep.subr.mxu0 %v887
      %894 = vmatpush1.msra.mxu0 %v886
      %895 = vmatprep.subr.mxu0 0.0
      %896 = vmatpush1.msra.mxu0 0.0
      %897 = vmatprep.subr.mxu0 0.0
      %898 = vmatpush1.msra.mxu0 0.0
      %899 = vmatprep.subr.mxu0 0.0
      %900 = vmatpush1.msra.mxu0 0.0
      %901 = vmatprep.subr.mxu0 0.0
      %902 = vmatpush1.msra.mxu0 0.0
      %903 = vmatprep.subr.mxu0 0.0
      %904 = vmatpush1.msra.mxu0 0.0
      %905 = vmatprep.subr.mxu0 0.0
      %906 = vmatpush1.msra.mxu0 0.0
      %907 = vmatprep.subr.mxu0 0.0
      %908 = vmatpush1.msra.mxu0 0.0
      %909 = vmatprep.subr.mxu0 0.0
      %910 = vmatpush1.msra.mxu0 0.0
      %911 = vmatprep.subr.mxu0 0.0
      %912 = vmatpush1.msra.mxu0 0.0
      %913 = vmatprep.subr.mxu0 0.0
      %914 = vmatpush1.msra.mxu0 0.0
      %915 = vmatprep.subr.mxu0 0.0
      %916 = vmatpush1.msra.mxu0 0.0
      %917 = vmatprep.subr.mxu0 0.0
      %918 = vmatpush1.msra.mxu0 0.0
      %919 = vmatprep.subr.mxu0 0.0
      %920 = vmatpush1.msra.mxu0 0.0
      %921 = vmatprep.subr.mxu0 0.0
      %922 = vmatpush1.msra.mxu0 0.0
      %923 = vmatprep.subr.mxu0 0.0
      %924 = vmatpush1.msra.mxu0 0.0
      %925 = vmatprep.subr.mxu0 0.0
      %926 = vmatpush1.msra.mxu0 0.0
      %927 = vmatprep.subr.mxu0 0.0
      %928 = vmatpush1.msra.mxu0 0.0
      %929 = vmatprep.subr.mxu0 0.0
      %930 = vmatpush1.msra.mxu0 0.0
      %931 = vmatprep.subr.mxu0 0.0
      %932 = vmatpush1.msra.mxu0 0.0
      %933 = vmatprep.subr.mxu0 0.0
      %934 = vmatpush1.msra.mxu0 0.0
      %935 = vmatprep.subr.mxu0 0.0
      %936 = vmatpush1.msra.mxu0 0.0
      %937 = vmatprep.subr.mxu0 0.0
      %938 = vmatpush1.msra.mxu0 0.0
      %939 = vmatprep.subr.mxu0 0.0
      %940 = vmatpush1.msra.mxu0 0.0
      %941 = vmatprep.subr.mxu0 0.0
      %942 = vmatpush1.msra.mxu0 0.0
      %943 = vmatprep.subr.mxu0 0.0
      %944 = vmatpush1.msra.mxu0 0.0
      %945 = vmatprep.subr.mxu0 0.0
      %946 = vmatpush1.msra.mxu0 0.0
      %947 = vmatprep.subr.mxu0 0.0
      %948 = vmatpush1.msra.mxu0 0.0
      %949 = vmatprep.subr.mxu0 0.0
      %950 = vmatpush1.msra.mxu0 0.0
      %951 = vmatprep.subr.mxu0 0.0
      %952 = vmatpush1.msra.mxu0 0.0
      %953 = vmatprep.subr.mxu0 0.0
      %954 = vmatpush1.msra.mxu0 0.0
      %955 = vmatprep.subr.mxu0 0.0
      %956 = vmatpush1.msra.mxu0 0.0
      %957 = vmatprep.mubr.f32.mxu0 0.0
      %958 = vmatmul.mubr.f32.gmra.mrb[0].mxu0 %v891
      %v959 = vpop.f32.mrb[0].mxu0
      %v960 = vadd.f32 0.0, %v959
      %v961 = vpop.f32.mrb[0].mxu0
      %v962 = vadd.f32 0.0, %v961
      %963 = vdwg.mxu0
      %v964 = vadd.f32 %v860, %v960
      %v965 = vadd.f32 %v861, %v962
      %s966 = scalar_lea.vmem %s1, 56
      %v967 = vld [vmem:[%s966] sm:$0xff]
      %968 = vrot.lane.b32.xlu0 %v286, 95
      %v969 = vpop.permute.xlu0 %968
      %970 = vrot.lane.b32.xlu0 %v287, 95
      %v971 = vpop.permute.xlu0 %970
      %972 = vrot.lane.b32.xlu0 %v291, 95
      %v973 = vpop.permute.xlu0 %972
      %vm974 = vcmask 777216
      %v975 = vsel %vm974, %v969, %v971
      %v976 = vsel %vm974, %v971, %v973
      %v980 = vsel %vm308, %v967, 0
      %982 = vmatprep.subr.mxu0 %v976
      %983 = vmatpush1.msra.mxu0 %v975
      %984 = vmatprep.subr.mxu0 0.0
      %985 = vmatpush1.msra.mxu0 0.0
      %986 = vmatprep.subr.mxu0 0.0
      %987 = vmatpush1.msra.mxu0 0.0
      %988 = vmatprep.subr.mxu0 0.0
      %989 = vmatpush1.msra.mxu0 0.0
      %990 = vmatprep.subr.mxu0 0.0
      %991 = vmatpush1.msra.mxu0 0.0
      %992 = vmatprep.subr.mxu0 0.0
      %993 = vmatpush1.msra.mxu0 0.0
      %994 = vmatprep.subr.mxu0 0.0
      %995 = vmatpush1.msra.mxu0 0.0
      %996 = vmatprep.subr.mxu0 0.0
      %997 = vmatpush1.msra.mxu0 0.0
      %998 = vmatprep.subr.mxu0 0.0
      %999 = vmatpush1.msra.mxu0 0.0
      %1000 = vmatprep.subr.mxu0 0.0
      %1001 = vmatpush1.msra.mxu0 0.0
      %1002 = vmatprep.subr.mxu0 0.0
      %1003 = vmatpush1.msra.mxu0 0.0
      %1004 = vmatprep.subr.mxu0 0.0
      %1005 = vmatpush1.msra.mxu0 0.0
      %1006 = vmatprep.subr.mxu0 0.0
      %1007 = vmatpush1.msra.mxu0 0.0
      %1008 = vmatprep.subr.mxu0 0.0
      %1009 = vmatpush1.msra.mxu0 0.0
      %1010 = vmatprep.subr.mxu0 0.0
      %1011 = vmatpush1.msra.mxu0 0.0
      %1012 = vmatprep.subr.mxu0 0.0
      %1013 = vmatpush1.msra.mxu0 0.0
      %1014 = vmatprep.subr.mxu0 0.0
      %1015 = vmatpush1.msra.mxu0 0.0
      %1016 = vmatprep.subr.mxu0 0.0
      %1017 = vmatpush1.msra.mxu0 0.0
      %1018 = vmatprep.subr.mxu0 0.0
      %1019 = vmatpush1.msra.mxu0 0.0
      %1020 = vmatprep.subr.mxu0 0.0
      %1021 = vmatpush1.msra.mxu0 0.0
      %1022 = vmatprep.subr.mxu0 0.0
      %1023 = vmatpush1.msra.mxu0 0.0
      %1024 = vmatprep.subr.mxu0 0.0
      %1025 = vmatpush1.msra.mxu0 0.0
      %1026 = vmatprep.subr.mxu0 0.0
      %1027 = vmatpush1.msra.mxu0 0.0
      %1028 = vmatprep.subr.mxu0 0.0
      %1029 = vmatpush1.msra.mxu0 0.0
      %1030 = vmatprep.subr.mxu0 0.0
      %1031 = vmatpush1.msra.mxu0 0.0
      %1032 = vmatprep.subr.mxu0 0.0
      %1033 = vmatpush1.msra.mxu0 0.0
      %1034 = vmatprep.subr.mxu0 0.0
      %1035 = vmatpush1.msra.mxu0 0.0
      %1036 = vmatprep.subr.mxu0 0.0
      %1037 = vmatpush1.msra.mxu0 0.0
      %1038 = vmatprep.subr.mxu0 0.0
      %1039 = vmatpush1.msra.mxu0 0.0
      %1040 = vmatprep.subr.mxu0 0.0
      %1041 = vmatpush1.msra.mxu0 0.0
      %1042 = vmatprep.subr.mxu0 0.0
      %1043 = vmatpush1.msra.mxu0 0.0
      %1044 = vmatprep.subr.mxu0 0.0
      %1045 = vmatpush1.msra.mxu0 0.0
      %1046 = vmatprep.mubr.f32.mxu0 0.0
      %1047 = vmatmul.mubr.f32.gmra.mrb[0].mxu0 %v980
      %v1048 = vpop.f32.mrb[0].mxu0
      %v1049 = vadd.f32 0.0, %v1048
      %v1050 = vpop.f32.mrb[0].mxu0
      %v1051 = vadd.f32 0.0, %v1050
      %1052 = vdwg.mxu0
      %v1053 = vadd.f32 %v964, %v1049
      %v1054 = vadd.f32 %v965, %v1051
      %1055 = vrot.lane.b32.xlu0 %v266, 34
      %v1056 = vpop.permute.xlu0 %1055
      %1057 = vrot.lane.b32.xlu0 %v267, 34
      %v1058 = vpop.permute.xlu0 %1057
      %vm1059 = vcmask 277504
      %v1060 = vsel %vm1059, %v1056, %v1058
      %v1064 = vmul.f32 %v286, %v1056
      %v1065 = vmul.f32 %v287, %v1060
      %v1066 = vmul.f32 %v291, %v1058
      %s1067 = scalar_lea.vmem %s1, 64
      %v1068 = vld [vmem:[%s1067] sm:$0xff]
      %1072 = vrot.lane.b32.xlu0 %v1064, 94
      %v1073 = vpop.permute.xlu0 %1072
      %1074 = vrot.lane.b32.xlu0 %v1065, 94
      %v1075 = vpop.permute.xlu0 %1074
      %1076 = vrot.lane.b32.xlu0 %v1066, 94
      %v1077 = vpop.permute.xlu0 %1076
      %vm1078 = vcmask 769024
      %v1079 = vsel %vm1078, %v1073, %v1075
      %v1080 = vsel %vm1078, %v1075, %v1077
      %v1084 = vsel %vm308, %v1068, 0
      %1086 = vmatprep.subr.mxu0 %v1080
      %1087 = vmatpush1.msra.mxu0 %v1079
      %1088 = vmatprep.subr.mxu0 0.0
      %1089 = vmatpush1.msra.mxu0 0.0
      %1090 = vmatprep.subr.mxu0 0.0
      %1091 = vmatpush1.msra.mxu0 0.0
      %1092 = vmatprep.subr.mxu0 0.0
      %1093 = vmatpush1.msra.mxu0 0.0
      %1094 = vmatprep.subr.mxu0 0.0
      %1095 = vmatpush1.msra.mxu0 0.0
      %1096 = vmatprep.subr.mxu0 0.0
      %1097 = vmatpush1.msra.mxu0 0.0
      %1098 = vmatprep.subr.mxu0 0.0
      %1099 = vmatpush1.msra.mxu0 0.0
      %1100 = vmatprep.subr.mxu0 0.0
      %1101 = vmatpush1.msra.mxu0 0.0
      %1102 = vmatprep.subr.mxu0 0.0
      %1103 = vmatpush1.msra.mxu0 0.0
      %1104 = vmatprep.subr.mxu0 0.0
      %1105 = vmatpush1.msra.mxu0 0.0
      %1106 = vmatprep.subr.mxu0 0.0
      %1107 = vmatpush1.msra.mxu0 0.0
      %1108 = vmatprep.subr.mxu0 0.0
      %1109 = vmatpush1.msra.mxu0 0.0
      %1110 = vmatprep.subr.mxu0 0.0
      %1111 = vmatpush1.msra.mxu0 0.0
      %1112 = vmatprep.subr.mxu0 0.0
      %1113 = vmatpush1.msra.mxu0 0.0
      %1114 = vmatprep.subr.mxu0 0.0
      %1115 = vmatpush1.msra.mxu0 0.0
      %1116 = vmatprep.subr.mxu0 0.0
      %1117 = vmatpush1.msra.mxu0 0.0
      %1118 = vmatprep.subr.mxu0 0.0
      %1119 = vmatpush1.msra.mxu0 0.0
      %1120 = vmatprep.subr.mxu0 0.0
      %1121 = vmatpush1.msra.mxu0 0.0
      %1122 = vmatprep.subr.mxu0 0.0
      %1123 = vmatpush1.msra.mxu0 0.0
      %1124 = vmatprep.subr.mxu0 0.0
      %1125 = vmatpush1.msra.mxu0 0.0
      %1126 = vmatprep.subr.mxu0 0.0
      %1127 = vmatpush1.msra.mxu0 0.0
      %1128 = vmatprep.subr.mxu0 0.0
      %1129 = vmatpush1.msra.mxu0 0.0
      %1130 = vmatprep.subr.mxu0 0.0
      %1131 = vmatpush1.msra.mxu0 0.0
      %1132 = vmatprep.subr.mxu0 0.0
      %1133 = vmatpush1.msra.mxu0 0.0
      %1134 = vmatprep.subr.mxu0 0.0
      %1135 = vmatpush1.msra.mxu0 0.0
      %1136 = vmatprep.subr.mxu0 0.0
      %1137 = vmatpush1.msra.mxu0 0.0
      %1138 = vmatprep.subr.mxu0 0.0
      %1139 = vmatpush1.msra.mxu0 0.0
      %1140 = vmatprep.subr.mxu0 0.0
      %1141 = vmatpush1.msra.mxu0 0.0
      %1142 = vmatprep.subr.mxu0 0.0
      %1143 = vmatpush1.msra.mxu0 0.0
      %1144 = vmatprep.subr.mxu0 0.0
      %1145 = vmatpush1.msra.mxu0 0.0
      %1146 = vmatprep.subr.mxu0 0.0
      %1147 = vmatpush1.msra.mxu0 0.0
      %1148 = vmatprep.subr.mxu0 0.0
      %1149 = vmatpush1.msra.mxu0 0.0
      %1150 = vmatprep.mubr.f32.mxu0 0.0
      %1151 = vmatmul.mubr.f32.gmra.mrb[0].mxu0 %v1084
      %v1152 = vpop.f32.mrb[0].mxu0
      %v1153 = vadd.f32 0.0, %v1152
      %v1154 = vpop.f32.mrb[0].mxu0
      %v1155 = vadd.f32 0.0, %v1154
      %1156 = vdwg.mxu0
      %v1157 = vadd.f32 %v1053, %v1153
      %v1158 = vadd.f32 %v1054, %v1155
      %v1159 = vld [vmem:[%s2] sm:$0xff]
      %1161 = vset.pattern.permute.xlu0 0
      %1162 = vperm.xlu0 %1161, %v1159
      %v1163 = vpop.permute.xlu0 %1162
      %v1165 = vadd.f32 %v1157, %v1163
      %v1166 = vadd.f32 %v1158, %v1163
      %v1167 = vadd.f32 %v268, %v1165
      %v1168 = vadd.f32 %v269, %v1166
      %1169 = vst [vmem:[%s224] sm:$0xff] %v1167
      %1170 = vst [vmem:[%s224 + $0x8] sm:$0xff] %v1168
      %1173 = vrot.lane.b32.xlu0 %v1167, 17
      %v1174 = vpop.permute.xlu0 %1173
      %1175 = vrot.lane.b32.xlu0 %v1168, 17
      %v1176 = vpop.permute.xlu0 %1175
      %v1177 = vsel %vm225, %v1174, %v1176
      %1181 = vst.msk [vmem:[#allocation2] sm:$0xff] %vm282, %v1174
      %1182 = vst [vmem:[#allocation2 + $0x8] sm:$0xff] %v1177
      %1183 = vst.msk [vmem:[#allocation2 + $0x10] sm:$0xff] %vm225, %v1176
      %v1184 = vld [vmem:[#allocation2] sm:$0xff]
      %v1185 = vld [vmem:[#allocation2 + $0x8] sm:$0xff]
      %v1186 = vmul.f32 %v1184, %v260
      %v1187 = vmul.f32 %v1185, %v261
      %v1188 = vld [vmem:[%s3] sm:$0xff]
      %v1189 = vld [vmem:[#allocation2 + $0x10] sm:$0xff]
      %s1190 = scalar_lea.vmem %s3, 8
      %v1191 = vld [vmem:[%s1190] sm:$0xff]
      %1195 = vrot.lane.b32.xlu0 %v1184, 127
      %v1196 = vpop.permute.xlu0 %1195
      %1197 = vrot.lane.b32.xlu0 %v1185, 127
      %v1198 = vpop.permute.xlu0 %1197
      %1199 = vrot.lane.b32.xlu0 %v1189, 127
      %v1200 = vpop.permute.xlu0 %1199
      %v1201 = vsel %vm303, %v1196, %v1198
      %v1202 = vsel %vm303, %v1198, %v1200
      %v1206 = vsel %vm308, %v1191, 0
      %1208 = vmatprep.subr.mxu0 %v1202
      %1209 = vmatpush1.msra.mxu0 %v1201
      %1210 = vmatprep.subr.mxu0 0.0
      %1211 = vmatpush1.msra.mxu0 0.0
      %1212 = vmatprep.subr.mxu0 0.0
      %1213 = vmatpush1.msra.mxu0 0.0
      %1214 = vmatprep.subr.mxu0 0.0
      %1215 = vmatpush1.msra.mxu0 0.0
      %1216 = vmatprep.subr.mxu0 0.0
      %1217 = vmatpush1.msra.mxu0 0.0
      %1218 = vmatprep.subr.mxu0 0.0
      %1219 = vmatpush1.msra.mxu0 0.0
      %1220 = vmatprep.subr.mxu0 0.0
      %1221 = vmatpush1.msra.mxu0 0.0
      %1222 = vmatprep.subr.mxu0 0.0
      %1223 = vmatpush1.msra.mxu0 0.0
      %1224 = vmatprep.subr.mxu0 0.0
      %1225 = vmatpush1.msra.mxu0 0.0
      %1226 = vmatprep.subr.mxu0 0.0
      %1227 = vmatpush1.msra.mxu0 0.0
      %1228 = vmatprep.subr.mxu0 0.0
      %1229 = vmatpush1.msra.mxu0 0.0
      %1230 = vmatprep.subr.mxu0 0.0
      %1231 = vmatpush1.msra.mxu0 0.0
      %1232 = vmatprep.subr.mxu0 0.0
      %1233 = vmatpush1.msra.mxu0 0.0
      %1234 = vmatprep.subr.mxu0 0.0
      %1235 = vmatpush1.msra.mxu0 0.0
      %1236 = vmatprep.subr.mxu0 0.0
      %1237 = vmatpush1.msra.mxu0 0.0
      %1238 = vmatprep.subr.mxu0 0.0
      %1239 = vmatpush1.msra.mxu0 0.0
      %1240 = vmatprep.subr.mxu0 0.0
      %1241 = vmatpush1.msra.mxu0 0.0
      %1242 = vmatprep.subr.mxu0 0.0
      %1243 = vmatpush1.msra.mxu0 0.0
      %1244 = vmatprep.subr.mxu0 0.0
      %1245 = vmatpush1.msra.mxu0 0.0
      %1246 = vmatprep.subr.mxu0 0.0
      %1247 = vmatpush1.msra.mxu0 0.0
      %1248 = vmatprep.subr.mxu0 0.0
      %1249 = vmatpush1.msra.mxu0 0.0
      %1250 = vmatprep.subr.mxu0 0.0
      %1251 = vmatpush1.msra.mxu0 0.0
      %1252 = vmatprep.subr.mxu0 0.0
      %1253 = vmatpush1.msra.mxu0 0.0
      %1254 = vmatprep.subr.mxu0 0.0
      %1255 = vmatpush1.msra.mxu0 0.0
      %1256 = vmatprep.subr.mxu0 0.0
      %1257 = vmatpush1.msra.mxu0 0.0
      %1258 = vmatprep.subr.mxu0 0.0
      %1259 = vmatpush1.msra.mxu0 0.0
      %1260 = vmatprep.subr.mxu0 0.0
      %1261 = vmatpush1.msra.mxu0 0.0
      %1262 = vmatprep.subr.mxu0 0.0
      %1263 = vmatpush1.msra.mxu0 0.0
      %1264 = vmatprep.subr.mxu0 0.0
      %1265 = vmatpush1.msra.mxu0 0.0
      %1266 = vmatprep.subr.mxu0 0.0
      %1267 = vmatpush1.msra.mxu0 0.0
      %1268 = vmatprep.subr.mxu0 0.0
      %1269 = vmatpush1.msra.mxu0 0.0
      %1270 = vmatprep.subr.mxu0 0.0
      %1271 = vmatpush1.msra.mxu0 0.0
      %1272 = vmatprep.mubr.f32.mxu0 0.0
      %1273 = vmatmul.mubr.f32.gmra.mrb[0].mxu0 %v1206
      %v1274 = vpop.f32.mrb[0].mxu0
      %v1275 = vadd.f32 0.0, %v1274
      %v1276 = vpop.f32.mrb[0].mxu0
      %v1277 = vadd.f32 0.0, %v1276
      %1278 = vdwg.mxu0
      %v1280 = vsel %vm308, %v1188, 0
      %1282 = vmatprep.subr.mxu0 %v1187
      %1283 = vmatpush1.msra.mxu0 %v1186
      %1284 = vmatprep.subr.mxu0 0.0
      %1285 = vmatpush1.msra.mxu0 0.0
      %1286 = vmatprep.subr.mxu0 0.0
      %1287 = vmatpush1.msra.mxu0 0.0
      %1288 = vmatprep.subr.mxu0 0.0
      %1289 = vmatpush1.msra.mxu0 0.0
      %1290 = vmatprep.subr.mxu0 0.0
      %1291 = vmatpush1.msra.mxu0 0.0
      %1292 = vmatprep.subr.mxu0 0.0
      %1293 = vmatpush1.msra.mxu0 0.0
      %1294 = vmatprep.subr.mxu0 0.0
      %1295 = vmatpush1.msra.mxu0 0.0
      %1296 = vmatprep.subr.mxu0 0.0
      %1297 = vmatpush1.msra.mxu0 0.0
      %1298 = vmatprep.subr.mxu0 0.0
      %1299 = vmatpush1.msra.mxu0 0.0
      %1300 = vmatprep.subr.mxu0 0.0
      %1301 = vmatpush1.msra.mxu0 0.0
      %1302 = vmatprep.subr.mxu0 0.0
      %1303 = vmatpush1.msra.mxu0 0.0
      %1304 = vmatprep.subr.mxu0 0.0
      %1305 = vmatpush1.msra.mxu0 0.0
      %1306 = vmatprep.subr.mxu0 0.0
      %1307 = vmatpush1.msra.mxu0 0.0
      %1308 = vmatprep.subr.mxu0 0.0
      %1309 = vmatpush1.msra.mxu0 0.0
      %1310 = vmatprep.subr.mxu0 0.0
      %1311 = vmatpush1.msra.mxu0 0.0
      %1312 = vmatprep.subr.mxu0 0.0
      %1313 = vmatpush1.msra.mxu0 0.0
      %1314 = vmatprep.subr.mxu0 0.0
      %1315 = vmatpush1.msra.mxu0 0.0
      %1316 = vmatprep.subr.mxu0 0.0
      %1317 = vmatpush1.msra.mxu0 0.0
      %1318 = vmatprep.subr.mxu0 0.0
      %1319 = vmatpush1.msra.mxu0 0.0
      %1320 = vmatprep.subr.mxu0 0.0
      %1321 = vmatpush1.msra.mxu0 0.0
      %1322 = vmatprep.subr.mxu0 0.0
      %1323 = vmatpush1.msra.mxu0 0.0
      %1324 = vmatprep.subr.mxu0 0.0
      %1325 = vmatpush1.msra.mxu0 0.0
      %1326 = vmatprep.subr.mxu0 0.0
      %1327 = vmatpush1.msra.mxu0 0.0
      %1328 = vmatprep.subr.mxu0 0.0
      %1329 = vmatpush1.msra.mxu0 0.0
      %1330 = vmatprep.subr.mxu0 0.0
      %1331 = vmatpush1.msra.mxu0 0.0
      %1332 = vmatprep.subr.mxu0 0.0
      %1333 = vmatpush1.msra.mxu0 0.0
      %1334 = vmatprep.subr.mxu0 0.0
      %1335 = vmatpush1.msra.mxu0 0.0
      %1336 = vmatprep.subr.mxu0 0.0
      %1337 = vmatpush1.msra.mxu0 0.0
      %1338 = vmatprep.subr.mxu0 0.0
      %1339 = vmatpush1.msra.mxu0 0.0
      %1340 = vmatprep.subr.mxu0 0.0
      %1341 = vmatpush1.msra.mxu0 0.0
      %1342 = vmatprep.subr.mxu0 0.0
      %1343 = vmatpush1.msra.mxu0 0.0
      %1344 = vmatprep.subr.mxu0 0.0
      %1345 = vmatpush1.msra.mxu0 0.0
      %1346 = vmatprep.mubr.f32.mxu0 0.0
      %1347 = vmatmul.mubr.f32.gmra.mrb[0].mxu0 %v1280
      %v1348 = vpop.f32.mrb[0].mxu0
      %v1349 = vadd.f32 %v1275, %v1348
      %v1350 = vpop.f32.mrb[0].mxu0
      %v1351 = vadd.f32 %v1277, %v1350
      %1352 = vdwg.mxu0
      %v1353 = vmul.f32 %v1184, %v460
      %v1354 = vmul.f32 %v1185, %v464
      %v1355 = vmul.f32 %v1189, %v462
      %s1356 = scalar_lea.vmem %s3, 16
      %v1357 = vld [vmem:[%s1356] sm:$0xff]
      %1361 = vrot.lane.b32.xlu0 %v1353, 126
      %v1362 = vpop.permute.xlu0 %1361
      %1363 = vrot.lane.b32.xlu0 %v1354, 126
      %v1364 = vpop.permute.xlu0 %1363
      %1365 = vrot.lane.b32.xlu0 %v1355, 126
      %v1366 = vpop.permute.xlu0 %1365
      %v1367 = vsel %vm482, %v1362, %v1364
      %v1368 = vsel %vm482, %v1364, %v1366
      %v1372 = vsel %vm308, %v1357, 0
      %1374 = vmatprep.subr.mxu0 %v1368
      %1375 = vmatpush1.msra.mxu0 %v1367
      %1376 = vmatprep.subr.mxu0 0.0
      %1377 = vmatpush1.msra.mxu0 0.0
      %1378 = vmatprep.subr.mxu0 0.0
      %1379 = vmatpush1.msra.mxu0 0.0
      %1380 = vmatprep.subr.mxu0 0.0
      %1381 = vmatpush1.msra.mxu0 0.0
      %1382 = vmatprep.subr.mxu0 0.0
      %1383 = vmatpush1.msra.mxu0 0.0
      %1384 = vmatprep.subr.mxu0 0.0
      %1385 = vmatpush1.msra.mxu0 0.0
      %1386 = vmatprep.subr.mxu0 0.0
      %1387 = vmatpush1.msra.mxu0 0.0
      %1388 = vmatprep.subr.mxu0 0.0
      %1389 = vmatpush1.msra.mxu0 0.0
      %1390 = vmatprep.subr.mxu0 0.0
      %1391 = vmatpush1.msra.mxu0 0.0
      %1392 = vmatprep.subr.mxu0 0.0
      %1393 = vmatpush1.msra.mxu0 0.0
      %1394 = vmatprep.subr.mxu0 0.0
      %1395 = vmatpush1.msra.mxu0 0.0
      %1396 = vmatprep.subr.mxu0 0.0
      %1397 = vmatpush1.msra.mxu0 0.0
      %1398 = vmatprep.subr.mxu0 0.0
      %1399 = vmatpush1.msra.mxu0 0.0
      %1400 = vmatprep.subr.mxu0 0.0
      %1401 = vmatpush1.msra.mxu0 0.0
      %1402 = vmatprep.subr.mxu0 0.0
      %1403 = vmatpush1.msra.mxu0 0.0
      %1404 = vmatprep.subr.mxu0 0.0
      %1405 = vmatpush1.msra.mxu0 0.0
      %1406 = vmatprep.subr.mxu0 0.0
      %1407 = vmatpush1.msra.mxu0 0.0
      %1408 = vmatprep.subr.mxu0 0.0
      %1409 = vmatpush1.msra.mxu0 0.0
      %1410 = vmatprep.subr.mxu0 0.0
      %1411 = vmatpush1.msra.mxu0 0.0
      %1412 = vmatprep.subr.mxu0 0.0
      %1413 = vmatpush1.msra.mxu0 0.0
      %1414 = vmatprep.subr.mxu0 0.0
      %1415 = vmatpush1.msra.mxu0 0.0
      %1416 = vmatprep.subr.mxu0 0.0
      %1417 = vmatpush1.msra.mxu0 0.0
      %1418 = vmatprep.subr.mxu0 0.0
      %1419 = vmatpush1.msra.mxu0 0.0
      %1420 = vmatprep.subr.mxu0 0.0
      %1421 = vmatpush1.msra.mxu0 0.0
      %1422 = vmatprep.subr.mxu0 0.0
      %1423 = vmatpush1.msra.mxu0 0.0
      %1424 = vmatprep.subr.mxu0 0.0
      %1425 = vmatpush1.msra.mxu0 0.0
      %1426 = vmatprep.subr.mxu0 0.0
      %1427 = vmatpush1.msra.mxu0 0.0
      %1428 = vmatprep.subr.mxu0 0.0
      %1429 = vmatpush1.msra.mxu0 0.0
      %1430 = vmatprep.subr.mxu0 0.0
      %1431 = vmatpush1.msra.mxu0 0.0
      %1432 = vmatprep.subr.mxu0 0.0
      %1433 = vmatpush1.msra.mxu0 0.0
      %1434 = vmatprep.subr.mxu0 0.0
      %1435 = vmatpush1.msra.mxu0 0.0
      %1436 = vmatprep.subr.mxu0 0.0
      %1437 = vmatpush1.msra.mxu0 0.0
      %1438 = vmatprep.mubr.f32.mxu0 0.0
      %1439 = vmatmul.mubr.f32.gmra.mrb[0].mxu0 %v1372
      %v1440 = vpop.f32.mrb[0].mxu0
      %v1441 = vadd.f32 0.0, %v1440
      %v1442 = vpop.f32.mrb[0].mxu0
      %v1443 = vadd.f32 0.0, %v1442
      %1444 = vdwg.mxu0
      %v1445 = vadd.f32 %v1349, %v1441
      %v1446 = vadd.f32 %v1351, %v1443
      %v1447 = vmul.f32 %v1184, %v566
      %v1448 = vmul.f32 %v1185, %v570
      %v1449 = vmul.f32 %v1189, %v568
      %s1450 = scalar_lea.vmem %s3, 24
      %v1451 = vld [vmem:[%s1450] sm:$0xff]
      %1455 = vrot.lane.b32.xlu0 %v1447, 112
      %v1456 = vpop.permute.xlu0 %1455
      %1457 = vrot.lane.b32.xlu0 %v1448, 112
      %v1458 = vpop.permute.xlu0 %1457
      %1459 = vrot.lane.b32.xlu0 %v1449, 112
      %v1460 = vpop.permute.xlu0 %1459
      %v1461 = vsel %vm588, %v1456, %v1458
      %v1462 = vsel %vm588, %v1458, %v1460
      %v1466 = vsel %vm308, %v1451, 0
      %1468 = vmatprep.subr.mxu0 %v1462
      %1469 = vmatpush1.msra.mxu0 %v1461
      %1470 = vmatprep.subr.mxu0 0.0
      %1471 = vmatpush1.msra.mxu0 0.0
      %1472 = vmatprep.subr.mxu0 0.0
      %1473 = vmatpush1.msra.mxu0 0.0
      %1474 = vmatprep.subr.mxu0 0.0
      %1475 = vmatpush1.msra.mxu0 0.0
      %1476 = vmatprep.subr.mxu0 0.0
      %1477 = vmatpush1.msra.mxu0 0.0
      %1478 = vmatprep.subr.mxu0 0.0
      %1479 = vmatpush1.msra.mxu0 0.0
      %1480 = vmatprep.subr.mxu0 0.0
      %1481 = vmatpush1.msra.mxu0 0.0
      %1482 = vmatprep.subr.mxu0 0.0
      %1483 = vmatpush1.msra.mxu0 0.0
      %1484 = vmatprep.subr.mxu0 0.0
      %1485 = vmatpush1.msra.mxu0 0.0
      %1486 = vmatprep.subr.mxu0 0.0
      %1487 = vmatpush1.msra.mxu0 0.0
      %1488 = vmatprep.subr.mxu0 0.0
      %1489 = vmatpush1.msra.mxu0 0.0
      %1490 = vmatprep.subr.mxu0 0.0
      %1491 = vmatpush1.msra.mxu0 0.0
      %1492 = vmatprep.subr.mxu0 0.0
      %1493 = vmatpush1.msra.mxu0 0.0
      %1494 = vmatprep.subr.mxu0 0.0
      %1495 = vmatpush1.msra.mxu0 0.0
      %1496 = vmatprep.subr.mxu0 0.0
      %1497 = vmatpush1.msra.mxu0 0.0
      %1498 = vmatprep.subr.mxu0 0.0
      %1499 = vmatpush1.msra.mxu0 0.0
      %1500 = vmatprep.subr.mxu0 0.0
      %1501 = vmatpush1.msra.mxu0 0.0
      %1502 = vmatprep.subr.mxu0 0.0
      %1503 = vmatpush1.msra.mxu0 0.0
      %1504 = vmatprep.subr.mxu0 0.0
      %1505 = vmatpush1.msra.mxu0 0.0
      %1506 = vmatprep.subr.mxu0 0.0
      %1507 = vmatpush1.msra.mxu0 0.0
      %1508 = vmatprep.subr.mxu0 0.0
      %1509 = vmatpush1.msra.mxu0 0.0
      %1510 = vmatprep.subr.mxu0 0.0
      %1511 = vmatpush1.msra.mxu0 0.0
      %1512 = vmatprep.subr.mxu0 0.0
      %1513 = vmatpush1.msra.mxu0 0.0
      %1514 = vmatprep.subr.mxu0 0.0
      %1515 = vmatpush1.msra.mxu0 0.0
      %1516 = vmatprep.subr.mxu0 0.0
      %1517 = vmatpush1.msra.mxu0 0.0
      %1518 = vmatprep.subr.mxu0 0.0
      %1519 = vmatpush1.msra.mxu0 0.0
      %1520 = vmatprep.subr.mxu0 0.0
      %1521 = vmatpush1.msra.mxu0 0.0
      %1522 = vmatprep.subr.mxu0 0.0
      %1523 = vmatpush1.msra.mxu0 0.0
      %1524 = vmatprep.subr.mxu0 0.0
      %1525 = vmatpush1.msra.mxu0 0.0
      %1526 = vmatprep.subr.mxu0 0.0
      %1527 = vmatpush1.msra.mxu0 0.0
      %1528 = vmatprep.subr.mxu0 0.0
      %1529 = vmatpush1.msra.mxu0 0.0
      %1530 = vmatprep.subr.mxu0 0.0
      %1531 = vmatpush1.msra.mxu0 0.0
      %1532 = vmatprep.mubr.f32.mxu0 0.0
      %1533 = vmatmul.mubr.f32.gmra.mrb[0].mxu0 %v1466
      %v1534 = vpop.f32.mrb[0].mxu0
      %v1535 = vadd.f32 0.0, %v1534
      %v1536 = vpop.f32.mrb[0].mxu0
      %v1537 = vadd.f32 0.0, %v1536
      %1538 = vdwg.mxu0
      %v1539 = vadd.f32 %v1445, %v1535
      %v1540 = vadd.f32 %v1446, %v1537
      %s1541 = scalar_lea.vmem %s3, 32
      %v1542 = vld [vmem:[%s1541] sm:$0xff]
      %1543 = vrot.lane.b32.xlu0 %v1184, 111
      %v1544 = vpop.permute.xlu0 %1543
      %1545 = vrot.lane.b32.xlu0 %v1185, 111
      %v1546 = vpop.permute.xlu0 %1545
      %1547 = vrot.lane.b32.xlu0 %v1189, 111
      %v1548 = vpop.permute.xlu0 %1547
      %v1549 = vsel %vm677, %v1544, %v1546
      %v1550 = vsel %vm677, %v1546, %v1548
      %v1554 = vsel %vm308, %v1542, 0
      %1556 = vmatprep.subr.mxu0 %v1550
      %1557 = vmatpush1.msra.mxu0 %v1549
      %1558 = vmatprep.subr.mxu0 0.0
      %1559 = vmatpush1.msra.mxu0 0.0
      %1560 = vmatprep.subr.mxu0 0.0
      %1561 = vmatpush1.msra.mxu0 0.0
      %1562 = vmatprep.subr.mxu0 0.0
      %1563 = vmatpush1.msra.mxu0 0.0
      %1564 = vmatprep.subr.mxu0 0.0
      %1565 = vmatpush1.msra.mxu0 0.0
      %1566 = vmatprep.subr.mxu0 0.0
      %1567 = vmatpush1.msra.mxu0 0.0
      %1568 = vmatprep.subr.mxu0 0.0
      %1569 = vmatpush1.msra.mxu0 0.0
      %1570 = vmatprep.subr.mxu0 0.0
      %1571 = vmatpush1.msra.mxu0 0.0
      %1572 = vmatprep.subr.mxu0 0.0
      %1573 = vmatpush1.msra.mxu0 0.0
      %1574 = vmatprep.subr.mxu0 0.0
      %1575 = vmatpush1.msra.mxu0 0.0
      %1576 = vmatprep.subr.mxu0 0.0
      %1577 = vmatpush1.msra.mxu0 0.0
      %1578 = vmatprep.subr.mxu0 0.0
      %1579 = vmatpush1.msra.mxu0 0.0
      %1580 = vmatprep.subr.mxu0 0.0
      %1581 = vmatpush1.msra.mxu0 0.0
      %1582 = vmatprep.subr.mxu0 0.0
      %1583 = vmatpush1.msra.mxu0 0.0
      %1584 = vmatprep.subr.mxu0 0.0
      %1585 = vmatpush1.msra.mxu0 0.0
      %1586 = vmatprep.subr.mxu0 0.0
      %1587 = vmatpush1.msra.mxu0 0.0
      %1588 = vmatprep.subr.mxu0 0.0
      %1589 = vmatpush1.msra.mxu0 0.0
      %1590 = vmatprep.subr.mxu0 0.0
      %1591 = vmatpush1.msra.mxu0 0.0
      %1592 = vmatprep.subr.mxu0 0.0
      %1593 = vmatpush1.msra.mxu0 0.0
      %1594 = vmatprep.subr.mxu0 0.0
      %1595 = vmatpush1.msra.mxu0 0.0
      %1596 = vmatprep.subr.mxu0 0.0
      %1597 = vmatpush1.msra.mxu0 0.0
      %1598 = vmatprep.subr.mxu0 0.0
      %1599 = vmatpush1.msra.mxu0 0.0
      %1600 = vmatprep.subr.mxu0 0.0
      %1601 = vmatpush1.msra.mxu0 0.0
      %1602 = vmatprep.subr.mxu0 0.0
      %1603 = vmatpush1.msra.mxu0 0.0
      %1604 = vmatprep.subr.mxu0 0.0
      %1605 = vmatpush1.msra.mxu0 0.0
      %1606 = vmatprep.subr.mxu0 0.0
      %1607 = vmatpush1.msra.mxu0 0.0
      %1608 = vmatprep.subr.mxu0 0.0
      %1609 = vmatpush1.msra.mxu0 0.0
      %1610 = vmatprep.subr.mxu0 0.0
      %1611 = vmatpush1.msra.mxu0 0.0
      %1612 = vmatprep.subr.mxu0 0.0
      %1613 = vmatpush1.msra.mxu0 0.0
      %1614 = vmatprep.subr.mxu0 0.0
      %1615 = vmatpush1.msra.mxu0 0.0
      %1616 = vmatprep.subr.mxu0 0.0
      %1617 = vmatpush1.msra.mxu0 0.0
      %1618 = vmatprep.subr.mxu0 0.0
      %1619 = vmatpush1.msra.mxu0 0.0
      %1620 = vmatprep.mubr.f32.mxu0 0.0
      %1621 = vmatmul.mubr.f32.gmra.mrb[0].mxu0 %v1554
      %v1622 = vpop.f32.mrb[0].mxu0
      %v1623 = vadd.f32 0.0, %v1622
      %v1624 = vpop.f32.mrb[0].mxu0
      %v1625 = vadd.f32 0.0, %v1624
      %1626 = vdwg.mxu0
      %v1627 = vadd.f32 %v1539, %v1623
      %v1628 = vadd.f32 %v1540, %v1625
      %v1629 = vmul.f32 %v1184, %v759
      %v1630 = vmul.f32 %v1185, %v763
      %v1631 = vmul.f32 %v1189, %v761
      %s1632 = scalar_lea.vmem %s3, 40
      %v1633 = vld [vmem:[%s1632] sm:$0xff]
      %1637 = vrot.lane.b32.xlu0 %v1629, 110
      %v1638 = vpop.permute.xlu0 %1637
      %1639 = vrot.lane.b32.xlu0 %v1630, 110
      %v1640 = vpop.permute.xlu0 %1639
      %1641 = vrot.lane.b32.xlu0 %v1631, 110
      %v1642 = vpop.permute.xlu0 %1641
      %v1643 = vsel %vm781, %v1638, %v1640
      %v1644 = vsel %vm781, %v1640, %v1642
      %v1648 = vsel %vm308, %v1633, 0
      %1650 = vmatprep.subr.mxu0 %v1644
      %1651 = vmatpush1.msra.mxu0 %v1643
      %1652 = vmatprep.subr.mxu0 0.0
      %1653 = vmatpush1.msra.mxu0 0.0
      %1654 = vmatprep.subr.mxu0 0.0
      %1655 = vmatpush1.msra.mxu0 0.0
      %1656 = vmatprep.subr.mxu0 0.0
      %1657 = vmatpush1.msra.mxu0 0.0
      %1658 = vmatprep.subr.mxu0 0.0
      %1659 = vmatpush1.msra.mxu0 0.0
      %1660 = vmatprep.subr.mxu0 0.0
      %1661 = vmatpush1.msra.mxu0 0.0
      %1662 = vmatprep.subr.mxu0 0.0
      %1663 = vmatpush1.msra.mxu0 0.0
      %1664 = vmatprep.subr.mxu0 0.0
      %1665 = vmatpush1.msra.mxu0 0.0
      %1666 = vmatprep.subr.mxu0 0.0
      %1667 = vmatpush1.msra.mxu0 0.0
      %1668 = vmatprep.subr.mxu0 0.0
      %1669 = vmatpush1.msra.mxu0 0.0
      %1670 = vmatprep.subr.mxu0 0.0
      %1671 = vmatpush1.msra.mxu0 0.0
      %1672 = vmatprep.subr.mxu0 0.0
      %1673 = vmatpush1.msra.mxu0 0.0
      %1674 = vmatprep.subr.mxu0 0.0
      %1675 = vmatpush1.msra.mxu0 0.0
      %1676 = vmatprep.subr.mxu0 0.0
      %1677 = vmatpush1.msra.mxu0 0.0
      %1678 = vmatprep.subr.mxu0 0.0
      %1679 = vmatpush1.msra.mxu0 0.0
      %1680 = vmatprep.subr.mxu0 0.0
      %1681 = vmatpush1.msra.mxu0 0.0
      %1682 = vmatprep.subr.mxu0 0.0
      %1683 = vmatpush1.msra.mxu0 0.0
      %1684 = vmatprep.subr.mxu0 0.0
      %1685 = vmatpush1.msra.mxu0 0.0
      %1686 = vmatprep.subr.mxu0 0.0
      %1687 = vmatpush1.msra.mxu0 0.0
      %1688 = vmatprep.subr.mxu0 0.0
      %1689 = vmatpush1.msra.mxu0 0.0
      %1690 = vmatprep.subr.mxu0 0.0
      %1691 = vmatpush1.msra.mxu0 0.0
      %1692 = vmatprep.subr.mxu0 0.0
      %1693 = vmatpush1.msra.mxu0 0.0
      %1694 = vmatprep.subr.mxu0 0.0
      %1695 = vmatpush1.msra.mxu0 0.0
      %1696 = vmatprep.subr.mxu0 0.0
      %1697 = vmatpush1.msra.mxu0 0.0
      %1698 = vmatprep.subr.mxu0 0.0
      %1699 = vmatpush1.msra.mxu0 0.0
      %1700 = vmatprep.subr.mxu0 0.0
      %1701 = vmatpush1.msra.mxu0 0.0
      %1702 = vmatprep.subr.mxu0 0.0
      %1703 = vmatpush1.msra.mxu0 0.0
      %1704 = vmatprep.subr.mxu0 0.0
      %1705 = vmatpush1.msra.mxu0 0.0
      %1706 = vmatprep.subr.mxu0 0.0
      %1707 = vmatpush1.msra.mxu0 0.0
      %1708 = vmatprep.subr.mxu0 0.0
      %1709 = vmatpush1.msra.mxu0 0.0
      %1710 = vmatprep.subr.mxu0 0.0
      %1711 = vmatpush1.msra.mxu0 0.0
      %1712 = vmatprep.subr.mxu0 0.0
      %1713 = vmatpush1.msra.mxu0 0.0
      %1714 = vmatprep.mubr.f32.mxu0 0.0
      %1715 = vmatmul.mubr.f32.gmra.mrb[0].mxu0 %v1648
      %v1716 = vpop.f32.mrb[0].mxu0
      %v1717 = vadd.f32 0.0, %v1716
      %v1718 = vpop.f32.mrb[0].mxu0
      %v1719 = vadd.f32 0.0, %v1718
      %1720 = vdwg.mxu0
      %v1721 = vadd.f32 %v1627, %v1717
      %v1722 = vadd.f32 %v1628, %v1719
      %v1723 = vmul.f32 %v1184, %v863
      %v1724 = vmul.f32 %v1185, %v867
      %v1725 = vmul.f32 %v1189, %v865
      %s1726 = scalar_lea.vmem %s3, 48
      %v1727 = vld [vmem:[%s1726] sm:$0xff]
      %1731 = vrot.lane.b32.xlu0 %v1723, 96
      %v1732 = vpop.permute.xlu0 %1731
      %1733 = vrot.lane.b32.xlu0 %v1724, 96
      %v1734 = vpop.permute.xlu0 %1733
      %1735 = vrot.lane.b32.xlu0 %v1725, 96
      %v1736 = vpop.permute.xlu0 %1735
      %v1737 = vsel %vm885, %v1732, %v1734
      %v1738 = vsel %vm885, %v1734, %v1736
      %v1742 = vsel %vm308, %v1727, 0
      %1744 = vmatprep.subr.mxu0 %v1738
      %1745 = vmatpush1.msra.mxu0 %v1737
      %1746 = vmatprep.subr.mxu0 0.0
      %1747 = vmatpush1.msra.mxu0 0.0
      %1748 = vmatprep.subr.mxu0 0.0
      %1749 = vmatpush1.msra.mxu0 0.0
      %1750 = vmatprep.subr.mxu0 0.0
      %1751 = vmatpush1.msra.mxu0 0.0
      %1752 = vmatprep.subr.mxu0 0.0
      %1753 = vmatpush1.msra.mxu0 0.0
      %1754 = vmatprep.subr.mxu0 0.0
      %1755 = vmatpush1.msra.mxu0 0.0
      %1756 = vmatprep.subr.mxu0 0.0
      %1757 = vmatpush1.msra.mxu0 0.0
      %1758 = vmatprep.subr.mxu0 0.0
      %1759 = vmatpush1.msra.mxu0 0.0
      %1760 = vmatprep.subr.mxu0 0.0
      %1761 = vmatpush1.msra.mxu0 0.0
      %1762 = vmatprep.subr.mxu0 0.0
      %1763 = vmatpush1.msra.mxu0 0.0
      %1764 = vmatprep.subr.mxu0 0.0
      %1765 = vmatpush1.msra.mxu0 0.0
      %1766 = vmatprep.subr.mxu0 0.0
      %1767 = vmatpush1.msra.mxu0 0.0
      %1768 = vmatprep.subr.mxu0 0.0
      %1769 = vmatpush1.msra.mxu0 0.0
      %1770 = vmatprep.subr.mxu0 0.0
      %1771 = vmatpush1.msra.mxu0 0.0
      %1772 = vmatprep.subr.mxu0 0.0
      %1773 = vmatpush1.msra.mxu0 0.0
      %1774 = vmatprep.subr.mxu0 0.0
      %1775 = vmatpush1.msra.mxu0 0.0
      %1776 = vmatprep.subr.mxu0 0.0
      %1777 = vmatpush1.msra.mxu0 0.0
      %1778 = vmatprep.subr.mxu0 0.0
      %1779 = vmatpush1.msra.mxu0 0.0
      %1780 = vmatprep.subr.mxu0 0.0
      %1781 = vmatpush1.msra.mxu0 0.0
      %1782 = vmatprep.subr.mxu0 0.0
      %1783 = vmatpush1.msra.mxu0 0.0
      %1784 = vmatprep.subr.mxu0 0.0
      %1785 = vmatpush1.msra.mxu0 0.0
      %1786 = vmatprep.subr.mxu0 0.0
      %1787 = vmatpush1.msra.mxu0 0.0
      %1788 = vmatprep.subr.mxu0 0.0
      %1789 = vmatpush1.msra.mxu0 0.0
      %1790 = vmatprep.subr.mxu0 0.0
      %1791 = vmatpush1.msra.mxu0 0.0
      %1792 = vmatprep.subr.mxu0 0.0
      %1793 = vmatpush1.msra.mxu0 0.0
      %1794 = vmatprep.subr.mxu0 0.0
      %1795 = vmatpush1.msra.mxu0 0.0
      %1796 = vmatprep.subr.mxu0 0.0
      %1797 = vmatpush1.msra.mxu0 0.0
      %1798 = vmatprep.subr.mxu0 0.0
      %1799 = vmatpush1.msra.mxu0 0.0
      %1800 = vmatprep.subr.mxu0 0.0
      %1801 = vmatpush1.msra.mxu0 0.0
      %1802 = vmatprep.subr.mxu0 0.0
      %1803 = vmatpush1.msra.mxu0 0.0
      %1804 = vmatprep.subr.mxu0 0.0
      %1805 = vmatpush1.msra.mxu0 0.0
      %1806 = vmatprep.subr.mxu0 0.0
      %1807 = vmatpush1.msra.mxu0 0.0
      %1808 = vmatprep.mubr.f32.mxu0 0.0
      %1809 = vmatmul.mubr.f32.gmra.mrb[0].mxu0 %v1742
      %v1810 = vpop.f32.mrb[0].mxu0
      %v1811 = vadd.f32 0.0, %v1810
      %v1812 = vpop.f32.mrb[0].mxu0
      %v1813 = vadd.f32 0.0, %v1812
      %1814 = vdwg.mxu0
      %v1815 = vadd.f32 %v1721, %v1811
      %v1816 = vadd.f32 %v1722, %v1813
      %s1817 = scalar_lea.vmem %s3, 56
      %v1818 = vld [vmem:[%s1817] sm:$0xff]
      %1819 = vrot.lane.b32.xlu0 %v1184, 95
      %v1820 = vpop.permute.xlu0 %1819
      %1821 = vrot.lane.b32.xlu0 %v1185, 95
      %v1822 = vpop.permute.xlu0 %1821
      %1823 = vrot.lane.b32.xlu0 %v1189, 95
      %v1824 = vpop.permute.xlu0 %1823
      %v1825 = vsel %vm974, %v1820, %v1822
      %v1826 = vsel %vm974, %v1822, %v1824
      %v1830 = vsel %vm308, %v1818, 0
      %1832 = vmatprep.subr.mxu0 %v1826
      %1833 = vmatpush1.msra.mxu0 %v1825
      %1834 = vmatprep.subr.mxu0 0.0
      %1835 = vmatpush1.msra.mxu0 0.0
      %1836 = vmatprep.subr.mxu0 0.0
      %1837 = vmatpush1.msra.mxu0 0.0
      %1838 = vmatprep.subr.mxu0 0.0
      %1839 = vmatpush1.msra.mxu0 0.0
      %1840 = vmatprep.subr.mxu0 0.0
      %1841 = vmatpush1.msra.mxu0 0.0
      %1842 = vmatprep.subr.mxu0 0.0
      %1843 = vmatpush1.msra.mxu0 0.0
      %1844 = vmatprep.subr.mxu0 0.0
      %1845 = vmatpush1.msra.mxu0 0.0
      %1846 = vmatprep.subr.mxu0 0.0
      %1847 = vmatpush1.msra.mxu0 0.0
      %1848 = vmatprep.subr.mxu0 0.0
      %1849 = vmatpush1.msra.mxu0 0.0
      %1850 = vmatprep.subr.mxu0 0.0
      %1851 = vmatpush1.msra.mxu0 0.0
      %1852 = vmatprep.subr.mxu0 0.0
      %1853 = vmatpush1.msra.mxu0 0.0
      %1854 = vmatprep.subr.mxu0 0.0
      %1855 = vmatpush1.msra.mxu0 0.0
      %1856 = vmatprep.subr.mxu0 0.0
      %1857 = vmatpush1.msra.mxu0 0.0
      %1858 = vmatprep.subr.mxu0 0.0
      %1859 = vmatpush1.msra.mxu0 0.0
      %1860 = vmatprep.subr.mxu0 0.0
      %1861 = vmatpush1.msra.mxu0 0.0
      %1862 = vmatprep.subr.mxu0 0.0
      %1863 = vmatpush1.msra.mxu0 0.0
      %1864 = vmatprep.subr.mxu0 0.0
      %1865 = vmatpush1.msra.mxu0 0.0
      %1866 = vmatprep.subr.mxu0 0.0
      %1867 = vmatpush1.msra.mxu0 0.0
      %1868 = vmatprep.subr.mxu0 0.0
      %1869 = vmatpush1.msra.mxu0 0.0
      %1870 = vmatprep.subr.mxu0 0.0
      %1871 = vmatpush1.msra.mxu0 0.0
      %1872 = vmatprep.subr.mxu0 0.0
      %1873 = vmatpush1.msra.mxu0 0.0
      %1874 = vmatprep.subr.mxu0 0.0
      %1875 = vmatpush1.msra.mxu0 0.0
      %1876 = vmatprep.subr.mxu0 0.0
      %1877 = vmatpush1.msra.mxu0 0.0
      %1878 = vmatprep.subr.mxu0 0.0
      %1879 = vmatpush1.msra.mxu0 0.0
      %1880 = vmatprep.subr.mxu0 0.0
      %1881 = vmatpush1.msra.mxu0 0.0
      %1882 = vmatprep.subr.mxu0 0.0
      %1883 = vmatpush1.msra.mxu0 0.0
      %1884 = vmatprep.subr.mxu0 0.0
      %1885 = vmatpush1.msra.mxu0 0.0
      %1886 = vmatprep.subr.mxu0 0.0
      %1887 = vmatpush1.msra.mxu0 0.0
      %1888 = vmatprep.subr.mxu0 0.0
      %1889 = vmatpush1.msra.mxu0 0.0
      %1890 = vmatprep.subr.mxu0 0.0
      %1891 = vmatpush1.msra.mxu0 0.0
      %1892 = vmatprep.subr.mxu0 0.0
      %1893 = vmatpush1.msra.mxu0 0.0
      %1894 = vmatprep.subr.mxu0 0.0
      %1895 = vmatpush1.msra.mxu0 0.0
      %1896 = vmatprep.mubr.f32.mxu0 0.0
      %1897 = vmatmul.mubr.f32.gmra.mrb[0].mxu0 %v1830
      %v1898 = vpop.f32.mrb[0].mxu0
      %v1899 = vadd.f32 0.0, %v1898
      %v1900 = vpop.f32.mrb[0].mxu0
      %v1901 = vadd.f32 0.0, %v1900
      %1902 = vdwg.mxu0
      %v1903 = vadd.f32 %v1815, %v1899
      %v1904 = vadd.f32 %v1816, %v1901
      %v1905 = vmul.f32 %v1184, %v1056
      %v1906 = vmul.f32 %v1185, %v1060
      %v1907 = vmul.f32 %v1189, %v1058
      %s1908 = scalar_lea.vmem %s3, 64
      %v1909 = vld [vmem:[%s1908] sm:$0xff]
      %1913 = vrot.lane.b32.xlu0 %v1905, 94
      %v1914 = vpop.permute.xlu0 %1913
      %1915 = vrot.lane.b32.xlu0 %v1906, 94
      %v1916 = vpop.permute.xlu0 %1915
      %1917 = vrot.lane.b32.xlu0 %v1907, 94
      %v1918 = vpop.permute.xlu0 %1917
      %v1919 = vsel %vm1078, %v1914, %v1916
      %v1920 = vsel %vm1078, %v1916, %v1918
      %v1924 = vsel %vm308, %v1909, 0
      %1926 = vmatprep.subr.mxu0 %v1920
      %1927 = vmatpush1.msra.mxu0 %v1919
      %1928 = vmatprep.subr.mxu0 0.0
      %1929 = vmatpush1.msra.mxu0 0.0
      %1930 = vmatprep.subr.mxu0 0.0
      %1931 = vmatpush1.msra.mxu0 0.0
      %1932 = vmatprep.subr.mxu0 0.0
      %1933 = vmatpush1.msra.mxu0 0.0
      %1934 = vmatprep.subr.mxu0 0.0
      %1935 = vmatpush1.msra.mxu0 0.0
      %1936 = vmatprep.subr.mxu0 0.0
      %1937 = vmatpush1.msra.mxu0 0.0
      %1938 = vmatprep.subr.mxu0 0.0
      %1939 = vmatpush1.msra.mxu0 0.0
      %1940 = vmatprep.subr.mxu0 0.0
      %1941 = vmatpush1.msra.mxu0 0.0
      %1942 = vmatprep.subr.mxu0 0.0
      %1943 = vmatpush1.msra.mxu0 0.0
      %1944 = vmatprep.subr.mxu0 0.0
      %1945 = vmatpush1.msra.mxu0 0.0
      %1946 = vmatprep.subr.mxu0 0.0
      %1947 = vmatpush1.msra.mxu0 0.0
      %1948 = vmatprep.subr.mxu0 0.0
      %1949 = vmatpush1.msra.mxu0 0.0
      %1950 = vmatprep.subr.mxu0 0.0
      %1951 = vmatpush1.msra.mxu0 0.0
      %1952 = vmatprep.subr.mxu0 0.0
      %1953 = vmatpush1.msra.mxu0 0.0
      %1954 = vmatprep.subr.mxu0 0.0
      %1955 = vmatpush1.msra.mxu0 0.0
      %1956 = vmatprep.subr.mxu0 0.0
      %1957 = vmatpush1.msra.mxu0 0.0
      %1958 = vmatprep.subr.mxu0 0.0
      %1959 = vmatpush1.msra.mxu0 0.0
      %1960 = vmatprep.subr.mxu0 0.0
      %1961 = vmatpush1.msra.mxu0 0.0
      %1962 = vmatprep.subr.mxu0 0.0
      %1963 = vmatpush1.msra.mxu0 0.0
      %1964 = vmatprep.subr.mxu0 0.0
      %1965 = vmatpush1.msra.mxu0 0.0
      %1966 = vmatprep.subr.mxu0 0.0
      %1967 = vmatpush1.msra.mxu0 0.0
      %1968 = vmatprep.subr.mxu0 0.0
      %1969 = vmatpush1.msra.mxu0 0.0
      %1970 = vmatprep.subr.mxu0 0.0
      %1971 = vmatpush1.msra.mxu0 0.0
      %1972 = vmatprep.subr.mxu0 0.0
      %1973 = vmatpush1.msra.mxu0 0.0
      %1974 = vmatprep.subr.mxu0 0.0
      %1975 = vmatpush1.msra.mxu0 0.0
      %1976 = vmatprep.subr.mxu0 0.0
      %1977 = vmatpush1.msra.mxu0 0.0
      %1978 = vmatprep.subr.mxu0 0.0
      %1979 = vmatpush1.msra.mxu0 0.0
      %1980 = vmatprep.subr.mxu0 0.0
      %1981 = vmatpush1.msra.mxu0 0.0
      %1982 = vmatprep.subr.mxu0 0.0
      %1983 = vmatpush1.msra.mxu0 0.0
      %1984 = vmatprep.subr.mxu0 0.0
      %1985 = vmatpush1.msra.mxu0 0.0
      %1986 = vmatprep.subr.mxu0 0.0
      %1987 = vmatpush1.msra.mxu0 0.0
      %1988 = vmatprep.subr.mxu0 0.0
      %1989 = vmatpush1.msra.mxu0 0.0
      %1990 = vmatprep.mubr.f32.mxu0 0.0
      %1991 = vmatmul.mubr.f32.gmra.mrb[0].mxu0 %v1924
      %v1992 = vpop.f32.mrb[0].mxu0
      %v1993 = vadd.f32 0.0, %v1992
      %v1994 = vpop.f32.mrb[0].mxu0
      %v1995 = vadd.f32 0.0, %v1994
      %1996 = vdwg.mxu0
      %v1997 = vadd.f32 %v1903, %v1993
      %v1998 = vadd.f32 %v1904, %v1995
      %v1999 = vld [vmem:[%s4] sm:$0xff]
      %2001 = vset.pattern.permute.xlu0 0
      %2002 = vperm.xlu0 %2001, %v1999
      %v2003 = vpop.permute.xlu0 %2002
      %v2005 = vadd.f32 %v1997, %v2003
      %v2006 = vadd.f32 %v1998, %v2003
      %v2007 = vadd.f32 %v270, %v2005
      %v2008 = vadd.f32 %v271, %v2006
      %2009 = vst [vmem:[%s224 + $0x10] sm:$0xff] %v2007
      %2010 = vst [vmem:[%s224 + $0x18] sm:$0xff] %v2008
      %p2011 = scmp.lt.s32.totalorder %s16, 1
      %s2012 = scalar_select %p2011, %s16, 1
      %s2013 = smul.addr %s2012, 4
      %s2014 = smul.addr %s2013, 8
      %s2015 = scalar_lea.vmem %s5, %s2014
      // Predicated region
      $region41: #{additive_block_forward.1} parent=39 // pred_check
        %p2016 = pneg %p144
      $region42: #{additive_block_forward.1} parent=39 // pred_check_branch
        %2018 = sbr.rel (%p2016) target = $region44
      $region43: #{additive_block_forward.1} parent=39 // pred_region
        _
      $region44: #{additive_block_forward.1} parent=39 // pred_fallthru
        _
    $region40: #{additive_block_forward.1} parent=5 // pred_fallthru
      _
    %p2019 = scmp.le.s32.totalorder 2, %s11
    // Predicated region
    $region45: #{additive_block_forward.1} parent=5 // pred_check
      %p2020 = pneg %p2019
    $region46: #{additive_block_forward.1} parent=5 // pred_check_branch
      %2022 = sbr.rel (%p2020) target = $region48
    $region47: #{additive_block_forward.1} parent=5 // pred_region
      %s2023 = ssub.s32 %s11, 2
      // Predicated region
      $region49: #{additive_block_forward.1} parent=47 // pred_check
        %p2024 = pneg %p150
      $region50: #{additive_block_forward.1} parent=47 // pred_check_branch
        %2026 = sbr.rel (%p2024) target = $region52
      $region51: #{additive_block_forward.1} parent=47 // pred_region
        %p2027 = scmp.lt.s32.totalorder %s17, 1
        %s2028 = scalar_select %p2027, %s17, 1
        %s2029 = smul.addr %s2028, 4
        %s2030 = smul.addr %s2029, 8
        %s2031 = scalar_lea.vmem %s5, %s2030
      $region52: #{additive_block_forward.1} parent=47 // pred_fallthru
        _
    $region48: #{additive_block_forward.1} parent=5 // pred_fallthru
      _
  $region6: #{additive_block_forward.1} parent=0 // loop_footer
    %s15 = sadd.s32 1, %s11
  $region7: #{additive_block_forward.1} parent=0 // loop_footer_branch
    %10 = sbr.rel target = $region3
  $region8: #{additive_block_forward.1} parent=0 // loop_exit
    _

</llo_original>
